<compile_context>
chip_gen: v5e
topology: v5e:2x2
jax: 0.10.0
libtpu: 0.0.40
codegen_flags: <defaults>
</compile_context>

<pallas_src>
import math

import jax
import jax.numpy as jnp
from jax.experimental import pallas as pl

# ----------------------------- model dimensions -----------------------------
B = 2            # batch
S = 8            # sequence length
H = 32           # transformer hidden size (stands in for 768)
NUM_HEADS = 4
HEAD_DIM = H // NUM_HEADS
FFN = 64         # feed-forward intermediate size
VOCAB = 100
NUM_EXTRA = 4    # num_extra_dims
NUM_LABELS = 3   # len(Constants.TARGET_LIST)
NUM_LAYERS = 2
LN_EPS = 1e-12   # BERT default

ATTN_SCALE = 1.0 / math.sqrt(HEAD_DIM)
INV_SQRT2 = 1.0 / math.sqrt(2.0)

# ---------------- f32 parameter-slab row layout (all rows 128 lanes) ----------------
CLS_WH_ROW = 0                        # rows [0, 32)  : classifier weight, hidden part
CLS_WE_ROW = CLS_WH_ROW + H           # rows [32, 36) : classifier weight, extra part
CLS_B_ROW = CLS_WE_ROW + NUM_EXTRA    # 36            : classifier bias
EMB_G_ROW = CLS_B_ROW + 1             # 37            : embedding LayerNorm gamma
EMB_B_ROW = EMB_G_ROW + 1             # 38            : embedding LayerNorm beta
LAYER_BASE = 40                       # 8 rows per layer, 8-aligned
ROWS_PER_LAYER = 8
FSLAB_ROWS = LAYER_BASE + ROWS_PER_LAYER * NUM_LAYERS   # 56 (multiple of 8)


# ------------------------------ in-kernel math -------------------------------
def _ln(x, g, b, eps=LN_EPS):
    mu = jnp.mean(x, axis=-1, keepdims=True)
    var = jnp.mean((x - mu) ** 2, axis=-1, keepdims=True)
    return (x - mu) * jax.lax.rsqrt(var + eps) * g + b


def _erf(x):
    # Abramowitz & Stegun 7.1.26 rational approximation, |error| < 1.5e-7.
    p = 0.3275911
    a1, a2, a3, a4, a5 = (0.254829592, -0.284496736, 1.421413741,
                          -1.453152027, 1.061405429)
    sgn = jnp.where(x >= 0.0, 1.0, -1.0)
    ax = jnp.abs(x)
    t = pl.reciprocal(1.0 + p * ax, approx=False)      # EUP, not a VALU divide
    poly = ((((a5 * t + a4) * t + a3) * t + a2) * t + a1) * t
    return sgn * (1.0 - poly * jnp.exp(-(ax * ax)))


def _gelu_exact(x):
    # Matches PyTorch nn.GELU / HF BERT default (erf GELU), not the tanh approx.
    return 0.5 * x * (1.0 + _erf(x * INV_SQRT2))


# ----------------------------- fused forward kernel --------------------------
def fused_forward_kernel(x_ref, bias_ref, extra_ref,
                         wqkv_ref, wo_ref, w1_ref, w2_ref, fp_ref,
                         o_ref):
    def prow(r, width):
        # (1, width) f32 parameter row from the packed slab (static slice).
        return fp_ref[r:r + 1, 0:width]

    # x arrives pre-flattened: (B*S, H) -- batch*seq on sublanes, hidden on lanes.
    x = _ln(x_ref[...], prow(EMB_G_ROW, H), prow(EMB_B_ROW, H))
    bias = bias_ref[...]                # (B*S, B*S) block-diag + padding additive bias

    for l in range(NUM_LAYERS):         # static layer loop, all weights resident in VMEM
        base = LAYER_BASE + ROWS_PER_LAYER * l
        xb = x.astype(jnp.bfloat16)

        # ONE fused QKV projection per layer: (16, 32) x (32, 96).
        qkv = (jnp.dot(xb, wqkv_ref[l], preferred_element_type=jnp.float32)
               + prow(base + 0, 3 * H))

        ctx_heads = []
        for h in range(NUM_HEADS):      # static head loop; lane slices at multiples of 8
            q = qkv[:, h * HEAD_DIM:(h + 1) * HEAD_DIM]
            k = qkv[:, H + h * HEAD_DIM:H + (h + 1) * HEAD_DIM]
            v = qkv[:, 2 * H + h * HEAD_DIM:2 * H + (h + 1) * HEAD_DIM]

            # Batched-over-B scores: one (16, 16) matmul; cross-batch & padded
            # keys are killed by the precomputed block-diagonal bias.
            s = jnp.dot(q, k.T, preferred_element_type=jnp.float32) * ATTN_SCALE + bias
            s = s - jnp.max(s, axis=-1, keepdims=True)
            p = jnp.exp(s)
            p = p * pl.reciprocal(jnp.sum(p, axis=-1, keepdims=True), approx=True)
            ctx_heads.append(jnp.dot(p, v, preferred_element_type=jnp.float32))

        ctx = jnp.concatenate(ctx_heads, axis=-1)       # (16, 32) lane concat

        # ONE output projection per layer against the unsplit Wo.
        attn = (jnp.dot(ctx.astype(jnp.bfloat16), wo_ref[l],
                        preferred_element_type=jnp.float32) + prow(base + 1, H))
        h1 = _ln(x + attn, prow(base + 2, H), prow(base + 3, H))

        ff = (jnp.dot(h1.astype(jnp.bfloat16), w1_ref[l],
                      preferred_element_type=jnp.float32) + prow(base + 4, FFN))
        ff = _gelu_exact(ff)
        ff = (jnp.dot(ff.astype(jnp.bfloat16), w2_ref[l],
                      preferred_element_type=jnp.float32) + prow(base + 5, H))
        x = _ln(h1 + ff, prow(base + 6, H), prow(base + 7, H))

    # Lane/sublane-dense epilogue: run the classifier on ALL 16 rows against the
    # 128-lane-padded weights, store a dense (16, 128) block; the wrapper picks
    # out the CLS rows / first NUM_LABELS lanes.
    cls_wh = fp_ref[CLS_WH_ROW:CLS_WH_ROW + H, :]           # (32, 128)
    cls_we = fp_ref[CLS_WE_ROW:CLS_WE_ROW + NUM_EXTRA, :]   # (4, 128)
    cls_b = fp_ref[CLS_B_ROW:CLS_B_ROW + 1, :]              # (1, 128)
    logits = (jnp.dot(x, cls_wh, preferred_element_type=jnp.float32)
              + jnp.dot(extra_ref[...], cls_we, preferred_element_type=jnp.float32)
              + cls_b)
    o_ref[...] = logits


# ------------------------------- param setup --------------------------------
def init_params(key):
    """Parameters in the 'natural' per-layer (in, out) layout, f32."""
    def nrm(k, shape, scale=0.02):
        return (scale * jax.random.normal(k, shape)).astype(jnp.float32)

    keys = jax.random.split(key, 4 + NUM_LAYERS)
    params = {
        "tok_emb": nrm(keys[0], (VOCAB, H)),
        "pos_emb": nrm(keys[1], (S, H)),
        "emb_ln_g": jnp.ones((1, H), jnp.float32),
        "emb_ln_b": jnp.zeros((1, H), jnp.float32),
        "cls_w": nrm(keys[2], (H + NUM_EXTRA, NUM_LABELS)),
        "cls_b": jnp.zeros((1, NUM_LABELS), jnp.float32),
        "layers": [],
    }
    for li in range(NUM_LAYERS):
        lk = jax.random.split(keys[4 + li], 6)
        params["layers"].append({
            "wq": nrm(lk[0], (H, H)), "bq": jnp.zeros((1, H), jnp.float32),
            "wk": nrm(lk[1], (H, H)), "bk": jnp.zeros((1, H), jnp.float32),
            "wv": nrm(lk[2], (H, H)), "bv": jnp.zeros((1, H), jnp.float32),
            "wo": nrm(lk[3], (H, H)), "bo": jnp.zeros((1, H), jnp.float32),
            "ln1_g": jnp.ones((1, H), jnp.float32), "ln1_b": jnp.zeros((1, H), jnp.float32),
            "w1": nrm(lk[4], (H, FFN)), "b1": jnp.zeros((1, FFN), jnp.float32),
            "w2": nrm(lk[5], (FFN, H)), "b2": jnp.zeros((1, H), jnp.float32),
            "ln2_g": jnp.ones((1, H), jnp.float32), "ln2_b": jnp.zeros((1, H), jnp.float32),
        })
    return params


def pack_params(params):
    """Done ONCE at init (hoisted out of forward).

    Produces:
      * wqkv (L, H, 3H), wo (L, H, H), w1 (L, H, FFN), w2 (L, FFN, H) in bf16
        (MXU operands),
      * one f32 (FSLAB_ROWS, 128) slab with every bias / LayerNorm / classifier
        parameter padded to 128 lanes, addressed by the static row constants.
    """
    bf = jnp.bfloat16
    layers = params["layers"]

    wqkv = jnp.stack([jnp.concatenate([lp["wq"], lp["wk"], lp["wv"]], axis=1)
                      for lp in layers], axis=0).astype(bf)          # (L, H, 3H)
    wo = jnp.stack([lp["wo"] for lp in layers], axis=0).astype(bf)   # (L, H, H)
    w1 = jnp.stack([lp["w1"] for lp in layers], axis=0).astype(bf)   # (L, H, FFN)
    w2 = jnp.stack([lp["w2"] for lp in layers], axis=0).astype(bf)   # (L, FFN, H)

    slab = jnp.zeros((FSLAB_ROWS, 128), jnp.float32)
    # concat([cls, extra]) @ W == cls @ W[:H] + extra @ W[H:]
    slab = slab.at[CLS_WH_ROW:CLS_WH_ROW + H, :NUM_LABELS].set(params["cls_w"][:H, :])
    slab = slab.at[CLS_WE_ROW:CLS_WE_ROW + NUM_EXTRA, :NUM_LABELS].set(params["cls_w"][H:, :])
    slab = slab.at[CLS_B_ROW, :NUM_LABELS].set(params["cls_b"].reshape(-1))
    slab = slab.at[EMB_G_ROW, :H].set(params["emb_ln_g"].reshape(-1))
    slab = slab.at[EMB_B_ROW, :H].set(params["emb_ln_b"].reshape(-1))
    for l, lp in enumerate(layers):
        base = LAYER_BASE + ROWS_PER_LAYER * l
        bqkv = jnp.concatenate([lp["bq"], lp["bk"], lp["bv"]], axis=1).reshape(-1)
        slab = slab.at[base + 0, :3 * H].set(bqkv)
        slab = slab.at[base + 1, :H].set(lp["bo"].reshape(-1))
        slab = slab.at[base + 2, :H].set(lp["ln1_g"].reshape(-1))
        slab = slab.at[base + 3, :H].set(lp["ln1_b"].reshape(-1))
        slab = slab.at[base + 4, :FFN].set(lp["b1"].reshape(-1))
        slab = slab.at[base + 5, :H].set(lp["b2"].reshape(-1))
        slab = slab.at[base + 6, :H].set(lp["ln2_g"].reshape(-1))
        slab = slab.at[base + 7, :H].set(lp["ln2_b"].reshape(-1))

    return {
        "tok_emb": params["tok_emb"], "pos_emb": params["pos_emb"],
        "wqkv": wqkv, "wo": wo, "w1": w1, "w2": w2, "fslab": slab,
    }


# ------------------------------ forward (model) -----------------------------
@jax.jit
def forward(packed, input_ids, extra_data, attention_mask):
    # Embedding lookup (gather) stays in plain JAX glue; everything else —
    # embedding LayerNorm, both encoder layers, CLS pooling + classifier —
    # runs inside ONE grid-less pallas_call with every operand resident in VMEM.
    x = packed["tok_emb"][input_ids] + packed["pos_emb"][None, :, :]     # (B, S, H)
    x = x.reshape(B * S, H).astype(jnp.float32)                          # batch*seq -> sublanes

    # Block-diagonal additive attention bias (0 where same batch & attended,
    # -1e9 otherwise), built once per call.  Lets the kernel compute one
    # (B*S, B*S) score matmul per head with no per-batch loop.
    key_ok = attention_mask.astype(jnp.float32).reshape(B * S)
    row_batch = jnp.arange(B * S) // S
    same_batch = (row_batch[:, None] == row_batch[None, :]).astype(jnp.float32)
    bias = (1.0 - same_batch * key_ok[None, :]) * (-1e9)                 # (B*S, B*S)

    # extra features broadcast to every row of their batch (classifier runs on
    # all 16 rows inside the kernel for a dense store; CLS rows picked below).
    extra_full = jnp.repeat(extra_data.astype(jnp.float32), S, axis=0)   # (B*S, E)

    out = pl.pallas_call(
        fused_forward_kernel,
        out_shape=jax.ShapeDtypeStruct((B * S, 128), jnp.float32),       # lane-dense store
    )(x, bias, extra_full,
      packed["wqkv"], packed["wo"], packed["w1"], packed["w2"], packed["fslab"])

    # CLS row of each batch (row b*S), first NUM_LABELS lanes.
    return out[::S, :NUM_LABELS]


if __name__ == "__main__":
    key = jax.random.PRNGKey(0)
    k_param, k_ids, k_extra = jax.random.split(key, 3)

    params = init_params(k_param)
    packed = pack_params(params)          # packing hoisted out of forward (runs once)

    input_ids = jax.random.randint(k_ids, (B, S), 0, VOCAB, dtype=jnp.int32)
    extra_data = jax.random.normal(k_extra, (B, NUM_EXTRA), dtype=jnp.float32)
    attention_mask = jnp.ones((B, S), jnp.int32).at[1, -2:].set(0)  # pad last 2 tokens of sample 1

    logits = forward(packed, input_ids, extra_data, attention_mask)
    logits = jax.block_until_ready(logits)

    assert logits.shape == (B, NUM_LABELS)
    assert bool(jnp.all(jnp.isfinite(logits)))
    print("KERNEL_OK")
</pallas_src>

<mosaic_0001>
module attributes {stable_mosaic.version = 11 : i64} {
  func.func @fused_forward_kernel(%arg0: memref<16x32xf32, #tpu.memory_space<vmem>>, %arg1: memref<16x16xf32, #tpu.memory_space<vmem>>, %arg2: memref<16x4xf32, #tpu.memory_space<vmem>>, %arg3: memref<2x32x96xbf16, #tpu.memory_space<vmem>>, %arg4: memref<2x32x32xbf16, #tpu.memory_space<vmem>>, %arg5: memref<2x32x64xbf16, #tpu.memory_space<vmem>>, %arg6: memref<2x64x32xbf16, #tpu.memory_space<vmem>>, %arg7: memref<56x128xf32, #tpu.memory_space<vmem>>, %arg8: memref<16x128xf32, #tpu.memory_space<vmem>>) attributes {dimension_semantics = [], scalar_prefetch = 0 : i64, scratch_operands = 0 : i64, tpu.core_type = #tpu.core_type<tc>} {
    %c0 = arith.constant 0 : index
    %c0_0 = arith.constant 0 : index
    %0 = vector.load %arg0[%c0, %c0_0] : memref<16x32xf32, #tpu.memory_space<vmem>>, vector<16x32xf32>
    %c37 = arith.constant 37 : index
    %c0_1 = arith.constant 0 : index
    %1 = vector.load %arg7[%c37, %c0_1] : memref<56x128xf32, #tpu.memory_space<vmem>>, vector<1x32xf32>
    %c38 = arith.constant 38 : index
    %c0_2 = arith.constant 0 : index
    %2 = vector.load %arg7[%c38, %c0_2] : memref<56x128xf32, #tpu.memory_space<vmem>>, vector<1x32xf32>
    %cst = arith.constant dense<0.000000e+00> : vector<16xf32>
    %3 = vector.multi_reduction <add>, %0, %cst [1] : vector<16x32xf32> to vector<16xf32>
    %4 = vector.shape_cast %3 : vector<16xf32> to vector<16x1xf32>
    %cst_3 = arith.constant 3.200000e+01 : f32
    %5 = vector.broadcast %cst_3 : f32 to vector<16x1xf32>
    %6 = arith.divf %4, %5 : vector<16x1xf32>
    %7 = vector.broadcast %6 : vector<16x1xf32> to vector<16x32xf32>
    %8 = arith.subf %0, %7 : vector<16x32xf32>
    %9 = arith.mulf %8, %8 : vector<16x32xf32>
    %cst_4 = arith.constant dense<0.000000e+00> : vector<16xf32>
    %10 = vector.multi_reduction <add>, %9, %cst_4 [1] : vector<16x32xf32> to vector<16xf32>
    %11 = vector.shape_cast %10 : vector<16xf32> to vector<16x1xf32>
    %cst_5 = arith.constant 3.200000e+01 : f32
    %12 = vector.broadcast %cst_5 : f32 to vector<16x1xf32>
    %13 = arith.divf %11, %12 : vector<16x1xf32>
    %14 = vector.broadcast %6 : vector<16x1xf32> to vector<16x32xf32>
    %15 = arith.subf %0, %14 : vector<16x32xf32>
    %cst_6 = arith.constant 9.99999996E-13 : f32
    %16 = vector.broadcast %cst_6 : f32 to vector<16x1xf32>
    %17 = arith.addf %13, %16 : vector<16x1xf32>
    %18 = math.rsqrt %17 : vector<16x1xf32>
    %19 = vector.broadcast %18 : vector<16x1xf32> to vector<16x32xf32>
    %20 = arith.mulf %15, %19 : vector<16x32xf32>
    %21 = vector.broadcast %1 : vector<1x32xf32> to vector<16x32xf32>
    %22 = arith.mulf %20, %21 : vector<16x32xf32>
    %23 = vector.broadcast %2 : vector<1x32xf32> to vector<16x32xf32>
    %24 = arith.addf %22, %23 : vector<16x32xf32>
    %c0_7 = arith.constant 0 : index
    %c0_8 = arith.constant 0 : index
    %25 = vector.load %arg1[%c0_7, %c0_8] : memref<16x16xf32, #tpu.memory_space<vmem>>, vector<16x16xf32>
    %26 = arith.truncf %24 : vector<16x32xf32> to vector<16x32xbf16>
    %c0_9 = arith.constant 0 : index
    %c0_10 = arith.constant 0 : index
    %c0_11 = arith.constant 0 : index
    %27 = vector.load %arg3[%c0_9, %c0_10, %c0_11] : memref<2x32x96xbf16, #tpu.memory_space<vmem>>, vector<1x32x96xbf16>
    %28 = vector.shape_cast %27 : vector<1x32x96xbf16> to vector<32x96xbf16>
    %cst_12 = arith.constant dense<0.000000e+00> : vector<16x96xf32>
    %29 = tpu.matmul %26, %28, %cst_12 {dimension_numbers = #tpu.dot_dimension_numbers<[1], [0], [0], [1], [0, 0, 1, 1], [], []>} : vector<16x32xbf16>, vector<32x96xbf16>, vector<16x96xf32> -> vector<16x96xf32>
    %c40 = arith.constant 40 : index
    %c0_13 = arith.constant 0 : index
    %30 = vector.load %arg7[%c40, %c0_13] : memref<56x128xf32, #tpu.memory_space<vmem>>, vector<1x96xf32>
    %31 = vector.broadcast %30 : vector<1x96xf32> to vector<16x96xf32>
    %32 = arith.addf %29, %31 : vector<16x96xf32>
    %33 = vector.extract_strided_slice %32 {offsets = [0, 0], sizes = [16, 8], strides = [1, 1]} : vector<16x96xf32> to vector<16x8xf32>
    %34 = vector.extract_strided_slice %32 {offsets = [0, 32], sizes = [16, 8], strides = [1, 1]} : vector<16x96xf32> to vector<16x8xf32>
    %35 = vector.extract_strided_slice %32 {offsets = [0, 64], sizes = [16, 8], strides = [1, 1]} : vector<16x96xf32> to vector<16x8xf32>
    %36 = tpu.transpose %34, [1, 0] : vector<16x8xf32> -> vector<8x16xf32>
    %cst_14 = arith.constant dense<0.000000e+00> : vector<16x16xf32>
    %37 = tpu.matmul %33, %36, %cst_14 {dimension_numbers = #tpu.dot_dimension_numbers<[1], [0], [0], [1], [0, 0, 1, 1], [], []>} : vector<16x8xf32>, vector<8x16xf32>, vector<16x16xf32> -> vector<16x16xf32>
    %cst_15 = arith.constant 0.353553385 : f32
    %38 = vector.broadcast %cst_15 : f32 to vector<16x16xf32>
    %39 = arith.mulf %37, %38 : vector<16x16xf32>
    %40 = arith.addf %39, %25 : vector<16x16xf32>
    %cst_16 = arith.constant dense<0xFF800000> : vector<16xf32>
    %41 = vector.multi_reduction <maximumf>, %40, %cst_16 [1] : vector<16x16xf32> to vector<16xf32>
    %42 = vector.shape_cast %41 : vector<16xf32> to vector<16x1xf32>
    %43 = vector.broadcast %42 : vector<16x1xf32> to vector<16x16xf32>
    %44 = arith.subf %40, %43 : vector<16x16xf32>
    %45 = math.exp %44 : vector<16x16xf32>
    %cst_17 = arith.constant dense<0.000000e+00> : vector<16xf32>
    %46 = vector.multi_reduction <add>, %45, %cst_17 [1] : vector<16x16xf32> to vector<16xf32>
    %47 = vector.shape_cast %46 : vector<16xf32> to vector<16x1xf32>
    %48 = tpu.reciprocal %47 {approx = true} : vector<16x1xf32> -> vector<16x1xf32>
    %49 = vector.broadcast %48 : vector<16x1xf32> to vector<16x16xf32>
    %50 = arith.mulf %45, %49 : vector<16x16xf32>
    %cst_18 = arith.constant dense<0.000000e+00> : vector<16x8xf32>
    %51 = tpu.matmul %50, %35, %cst_18 {dimension_numbers = #tpu.dot_dimension_numbers<[1], [0], [0], [1], [0, 0, 1, 1], [], []>} : vector<16x16xf32>, vector<16x8xf32>, vector<16x8xf32> -> vector<16x8xf32>
    %52 = vector.extract_strided_slice %32 {offsets = [0, 8], sizes = [16, 8], strides = [1, 1]} : vector<16x96xf32> to vector<16x8xf32>
    %53 = vector.extract_strided_slice %32 {offsets = [0, 40], sizes = [16, 8], strides = [1, 1]} : vector<16x96xf32> to vector<16x8xf32>
    %54 = vector.extract_strided_slice %32 {offsets = [0, 72], sizes = [16, 8], strides = [1, 1]} : vector<16x96xf32> to vector<16x8xf32>
    %55 = tpu.transpose %53, [1, 0] : vector<16x8xf32> -> vector<8x16xf32>
    %cst_19 = arith.constant dense<0.000000e+00> : vector<16x16xf32>
    %56 = tpu.matmul %52, %55, %cst_19 {dimension_numbers = #tpu.dot_dimension_numbers<[1], [0], [0], [1], [0, 0, 1, 1], [], []>} : vector<16x8xf32>, vector<8x16xf32>, vector<16x16xf32> -> vector<16x16xf32>
    %cst_20 = arith.constant 0.353553385 : f32
    %57 = vector.broadcast %cst_20 : f32 to vector<16x16xf32>
    %58 = arith.mulf %56, %57 : vector<16x16xf32>
    %59 = arith.addf %58, %25 : vector<16x16xf32>
    %cst_21 = arith.constant dense<0xFF800000> : vector<16xf32>
    %60 = vector.multi_reduction <maximumf>, %59, %cst_21 [1] : vector<16x16xf32> to vector<16xf32>
    %61 = vector.shape_cast %60 : vector<16xf32> to vector<16x1xf32>
    %62 = vector.broadcast %61 : vector<16x1xf32> to vector<16x16xf32>
    %63 = arith.subf %59, %62 : vector<16x16xf32>
    %64 = math.exp %63 : vector<16x16xf32>
    %cst_22 = arith.constant dense<0.000000e+00> : vector<16xf32>
    %65 = vector.multi_reduction <add>, %64, %cst_22 [1] : vector<16x16xf32> to vector<16xf32>
    %66 = vector.shape_cast %65 : vector<16xf32> to vector<16x1xf32>
    %67 = tpu.reciprocal %66 {approx = true} : vector<16x1xf32> -> vector<16x1xf32>
    %68 = vector.broadcast %67 : vector<16x1xf32> to vector<16x16xf32>
    %69 = arith.mulf %64, %68 : vector<16x16xf32>
    %cst_23 = arith.constant dense<0.000000e+00> : vector<16x8xf32>
    %70 = tpu.matmul %69, %54, %cst_23 {dimension_numbers = #tpu.dot_dimension_numbers<[1], [0], [0], [1], [0, 0, 1, 1], [], []>} : vector<16x16xf32>, vector<16x8xf32>, vector<16x8xf32> -> vector<16x8xf32>
    %71 = vector.extract_strided_slice %32 {offsets = [0, 16], sizes = [16, 8], strides = [1, 1]} : vector<16x96xf32> to vector<16x8xf32>
    %72 = vector.extract_strided_slice %32 {offsets = [0, 48], sizes = [16, 8], strides = [1, 1]} : vector<16x96xf32> to vector<16x8xf32>
    %73 = vector.extract_strided_slice %32 {offsets = [0, 80], sizes = [16, 8], strides = [1, 1]} : vector<16x96xf32> to vector<16x8xf32>
    %74 = tpu.transpose %72, [1, 0] : vector<16x8xf32> -> vector<8x16xf32>
    %cst_24 = arith.constant dense<0.000000e+00> : vector<16x16xf32>
    %75 = tpu.matmul %71, %74, %cst_24 {dimension_numbers = #tpu.dot_dimension_numbers<[1], [0], [0], [1], [0, 0, 1, 1], [], []>} : vector<16x8xf32>, vector<8x16xf32>, vector<16x16xf32> -> vector<16x16xf32>
    %cst_25 = arith.constant 0.353553385 : f32
    %76 = vector.broadcast %cst_25 : f32 to vector<16x16xf32>
    %77 = arith.mulf %75, %76 : vector<16x16xf32>
    %78 = arith.addf %77, %25 : vector<16x16xf32>
    %cst_26 = arith.constant dense<0xFF800000> : vector<16xf32>
    %79 = vector.multi_reduction <maximumf>, %78, %cst_26 [1] : vector<16x16xf32> to vector<16xf32>
    %80 = vector.shape_cast %79 : vector<16xf32> to vector<16x1xf32>
    %81 = vector.broadcast %80 : vector<16x1xf32> to vector<16x16xf32>
    %82 = arith.subf %78, %81 : vector<16x16xf32>
    %83 = math.exp %82 : vector<16x16xf32>
    %cst_27 = arith.constant dense<0.000000e+00> : vector<16xf32>
    %84 = vector.multi_reduction <add>, %83, %cst_27 [1] : vector<16x16xf32> to vector<16xf32>
    %85 = vector.shape_cast %84 : vector<16xf32> to vector<16x1xf32>
    %86 = tpu.reciprocal %85 {approx = true} : vector<16x1xf32> -> vector<16x1xf32>
    %87 = vector.broadcast %86 : vector<16x1xf32> to vector<16x16xf32>
    %88 = arith.mulf %83, %87 : vector<16x16xf32>
    %cst_28 = arith.constant dense<0.000000e+00> : vector<16x8xf32>
    %89 = tpu.matmul %88, %73, %cst_28 {dimension_numbers = #tpu.dot_dimension_numbers<[1], [0], [0], [1], [0, 0, 1, 1], [], []>} : vector<16x16xf32>, vector<16x8xf32>, vector<16x8xf32> -> vector<16x8xf32>
    %90 = vector.extract_strided_slice %32 {offsets = [0, 24], sizes = [16, 8], strides = [1, 1]} : vector<16x96xf32> to vector<16x8xf32>
    %91 = vector.extract_strided_slice %32 {offsets = [0, 56], sizes = [16, 8], strides = [1, 1]} : vector<16x96xf32> to vector<16x8xf32>
    %92 = vector.extract_strided_slice %32 {offsets = [0, 88], sizes = [16, 8], strides = [1, 1]} : vector<16x96xf32> to vector<16x8xf32>
    %93 = tpu.transpose %91, [1, 0] : vector<16x8xf32> -> vector<8x16xf32>
    %cst_29 = arith.constant dense<0.000000e+00> : vector<16x16xf32>
    %94 = tpu.matmul %90, %93, %cst_29 {dimension_numbers = #tpu.dot_dimension_numbers<[1], [0], [0], [1], [0, 0, 1, 1], [], []>} : vector<16x8xf32>, vector<8x16xf32>, vector<16x16xf32> -> vector<16x16xf32>
    %cst_30 = arith.constant 0.353553385 : f32
    %95 = vector.broadcast %cst_30 : f32 to vector<16x16xf32>
    %96 = arith.mulf %94, %95 : vector<16x16xf32>
    %97 = arith.addf %96, %25 : vector<16x16xf32>
    %cst_31 = arith.constant dense<0xFF800000> : vector<16xf32>
    %98 = vector.multi_reduction <maximumf>, %97, %cst_31 [1] : vector<16x16xf32> to vector<16xf32>
    %99 = vector.shape_cast %98 : vector<16xf32> to vector<16x1xf32>
    %100 = vector.broadcast %99 : vector<16x1xf32> to vector<16x16xf32>
    %101 = arith.subf %97, %100 : vector<16x16xf32>
    %102 = math.exp %101 : vector<16x16xf32>
    %cst_32 = arith.constant dense<0.000000e+00> : vector<16xf32>
    %103 = vector.multi_reduction <add>, %102, %cst_32 [1] : vector<16x16xf32> to vector<16xf32>
    %104 = vector.shape_cast %103 : vector<16xf32> to vector<16x1xf32>
    %105 = tpu.reciprocal %104 {approx = true} : vector<16x1xf32> -> vector<16x1xf32>
    %106 = vector.broadcast %105 : vector<16x1xf32> to vector<16x16xf32>
    %107 = arith.mulf %102, %106 : vector<16x16xf32>
    %cst_33 = arith.constant dense<0.000000e+00> : vector<16x8xf32>
    %108 = tpu.matmul %107, %92, %cst_33 {dimension_numbers = #tpu.dot_dimension_numbers<[1], [0], [0], [1], [0, 0, 1, 1], [], []>} : vector<16x16xf32>, vector<16x8xf32>, vector<16x8xf32> -> vector<16x8xf32>
    %109 = tpu.concatenate %51, %70, %89, %108 in 1 : vector<16x8xf32>, vector<16x8xf32>, vector<16x8xf32>, vector<16x8xf32> -> vector<16x32xf32>
    %110 = arith.truncf %109 : vector<16x32xf32> to vector<16x32xbf16>
    %c0_34 = arith.constant 0 : index
    %c0_35 = arith.constant 0 : index
    %c0_36 = arith.constant 0 : index
    %111 = vector.load %arg4[%c0_34, %c0_35, %c0_36] : memref<2x32x32xbf16, #tpu.memory_space<vmem>>, vector<1x32x32xbf16>
    %112 = vector.shape_cast %111 : vector<1x32x32xbf16> to vector<32x32xbf16>
    %cst_37 = arith.constant dense<0.000000e+00> : vector<16x32xf32>
    %113 = tpu.matmul %110, %112, %cst_37 {dimension_numbers = #tpu.dot_dimension_numbers<[1], [0], [0], [1], [0, 0, 1, 1], [], []>} : vector<16x32xbf16>, vector<32x32xbf16>, vector<16x32xf32> -> vector<16x32xf32>
    %c41 = arith.constant 41 : index
    %c0_38 = arith.constant 0 : index
    %114 = vector.load %arg7[%c41, %c0_38] : memref<56x128xf32, #tpu.memory_space<vmem>>, vector<1x32xf32>
    %115 = vector.broadcast %114 : vector<1x32xf32> to vector<16x32xf32>
    %116 = arith.addf %113, %115 : vector<16x32xf32>
    %117 = arith.addf %24, %116 : vector<16x32xf32>
    %c42 = arith.constant 42 : index
    %c0_39 = arith.constant 0 : index
    %118 = vector.load %arg7[%c42, %c0_39] : memref<56x128xf32, #tpu.memory_space<vmem>>, vector<1x32xf32>
    %c43 = arith.constant 43 : index
    %c0_40 = arith.constant 0 : index
    %119 = vector.load %arg7[%c43, %c0_40] : memref<56x128xf32, #tpu.memory_space<vmem>>, vector<1x32xf32>
    %cst_41 = arith.constant dense<0.000000e+00> : vector<16xf32>
    %120 = vector.multi_reduction <add>, %117, %cst_41 [1] : vector<16x32xf32> to vector<16xf32>
    %121 = vector.shape_cast %120 : vector<16xf32> to vector<16x1xf32>
    %cst_42 = arith.constant 3.200000e+01 : f32
    %122 = vector.broadcast %cst_42 : f32 to vector<16x1xf32>
    %123 = arith.divf %121, %122 : vector<16x1xf32>
    %124 = vector.broadcast %123 : vector<16x1xf32> to vector<16x32xf32>
    %125 = arith.subf %117, %124 : vector<16x32xf32>
    %126 = arith.mulf %125, %125 : vector<16x32xf32>
    %cst_43 = arith.constant dense<0.000000e+00> : vector<16xf32>
    %127 = vector.multi_reduction <add>, %126, %cst_43 [1] : vector<16x32xf32> to vector<16xf32>
    %128 = vector.shape_cast %127 : vector<16xf32> to vector<16x1xf32>
    %cst_44 = arith.constant 3.200000e+01 : f32
    %129 = vector.broadcast %cst_44 : f32 to vector<16x1xf32>
    %130 = arith.divf %128, %129 : vector<16x1xf32>
    %131 = vector.broadcast %123 : vector<16x1xf32> to vector<16x32xf32>
    %132 = arith.subf %117, %131 : vector<16x32xf32>
    %cst_45 = arith.constant 9.99999996E-13 : f32
    %133 = vector.broadcast %cst_45 : f32 to vector<16x1xf32>
    %134 = arith.addf %130, %133 : vector<16x1xf32>
    %135 = math.rsqrt %134 : vector<16x1xf32>
    %136 = vector.broadcast %135 : vector<16x1xf32> to vector<16x32xf32>
    %137 = arith.mulf %132, %136 : vector<16x32xf32>
    %138 = vector.broadcast %118 : vector<1x32xf32> to vector<16x32xf32>
    %139 = arith.mulf %137, %138 : vector<16x32xf32>
    %140 = vector.broadcast %119 : vector<1x32xf32> to vector<16x32xf32>
    %141 = arith.addf %139, %140 : vector<16x32xf32>
    %142 = arith.truncf %141 : vector<16x32xf32> to vector<16x32xbf16>
    %c0_46 = arith.constant 0 : index
    %c0_47 = arith.constant 0 : index
    %c0_48 = arith.constant 0 : index
    %143 = vector.load %arg5[%c0_46, %c0_47, %c0_48] : memref<2x32x64xbf16, #tpu.memory_space<vmem>>, vector<1x32x64xbf16>
    %144 = vector.shape_cast %143 : vector<1x32x64xbf16> to vector<32x64xbf16>
    %cst_49 = arith.constant dense<0.000000e+00> : vector<16x64xf32>
    %145 = tpu.matmul %142, %144, %cst_49 {dimension_numbers = #tpu.dot_dimension_numbers<[1], [0], [0], [1], [0, 0, 1, 1], [], []>} : vector<16x32xbf16>, vector<32x64xbf16>, vector<16x64xf32> -> vector<16x64xf32>
    %c44 = arith.constant 44 : index
    %c0_50 = arith.constant 0 : index
    %146 = vector.load %arg7[%c44, %c0_50] : memref<56x128xf32, #tpu.memory_space<vmem>>, vector<1x64xf32>
    %147 = vector.broadcast %146 : vector<1x64xf32> to vector<16x64xf32>
    %148 = arith.addf %145, %147 : vector<16x64xf32>
    %cst_51 = arith.constant 5.000000e-01 : f32
    %149 = vector.broadcast %cst_51 : f32 to vector<16x64xf32>
    %150 = arith.mulf %149, %148 : vector<16x64xf32>
    %cst_52 = arith.constant 0.707106769 : f32
    %151 = vector.broadcast %cst_52 : f32 to vector<16x64xf32>
    %152 = arith.mulf %148, %151 : vector<16x64xf32>
    %cst_53 = arith.constant 0.000000e+00 : f32
    %153 = vector.broadcast %cst_53 : f32 to vector<16x64xf32>
    %154 = arith.cmpf oge, %152, %153 : vector<16x64xf32>
    %cst_54 = arith.constant 1.000000e+00 : f32
    %cst_55 = arith.constant -1.000000e+00 : f32
    %155 = vector.broadcast %cst_54 : f32 to vector<16x64xf32>
    %156 = vector.broadcast %cst_55 : f32 to vector<16x64xf32>
    %157 = arith.select %154, %155, %156 : vector<16x64xi1>, vector<16x64xf32>
    %158 = math.absf %152 : vector<16x64xf32>
    %cst_56 = arith.constant 0.327591091 : f32
    %159 = vector.broadcast %cst_56 : f32 to vector<16x64xf32>
    %160 = arith.mulf %159, %158 : vector<16x64xf32>
    %cst_57 = arith.constant 1.000000e+00 : f32
    %161 = vector.broadcast %cst_57 : f32 to vector<16x64xf32>
    %162 = arith.addf %161, %160 : vector<16x64xf32>
    %163 = tpu.reciprocal %162 : vector<16x64xf32> -> vector<16x64xf32>
    %cst_58 = arith.constant 1.06140542 : f32
    %164 = vector.broadcast %cst_58 : f32 to vector<16x64xf32>
    %165 = arith.mulf %164, %163 : vector<16x64xf32>
    %cst_59 = arith.constant -1.45315206 : f32
    %166 = vector.broadcast %cst_59 : f32 to vector<16x64xf32>
    %167 = arith.addf %165, %166 : vector<16x64xf32>
    %168 = arith.mulf %167, %163 : vector<16x64xf32>
    %cst_60 = arith.constant 1.42141378 : f32
    %169 = vector.broadcast %cst_60 : f32 to vector<16x64xf32>
    %170 = arith.addf %168, %169 : vector<16x64xf32>
    %171 = arith.mulf %170, %163 : vector<16x64xf32>
    %cst_61 = arith.constant -0.284496725 : f32
    %172 = vector.broadcast %cst_61 : f32 to vector<16x64xf32>
    %173 = arith.addf %171, %172 : vector<16x64xf32>
    %174 = arith.mulf %173, %163 : vector<16x64xf32>
    %cst_62 = arith.constant 0.254829586 : f32
    %175 = vector.broadcast %cst_62 : f32 to vector<16x64xf32>
    %176 = arith.addf %174, %175 : vector<16x64xf32>
    %177 = arith.mulf %176, %163 : vector<16x64xf32>
    %178 = arith.mulf %158, %158 : vector<16x64xf32>
    %cst_63 = arith.constant 0.000000e+00 : f32
    %179 = vector.broadcast %cst_63 : f32 to vector<16x64xf32>
    %180 = arith.subf %179, %178 : vector<16x64xf32>
    %181 = math.exp %180 : vector<16x64xf32>
    %182 = arith.mulf %177, %181 : vector<16x64xf32>
    %cst_64 = arith.constant 1.000000e+00 : f32
    %183 = vector.broadcast %cst_64 : f32 to vector<16x64xf32>
    %184 = arith.subf %183, %182 : vector<16x64xf32>
    %185 = arith.mulf %157, %184 : vector<16x64xf32>
    %cst_65 = arith.constant 1.000000e+00 : f32
    %186 = vector.broadcast %cst_65 : f32 to vector<16x64xf32>
    %187 = arith.addf %186, %185 : vector<16x64xf32>
    %188 = arith.mulf %150, %187 : vector<16x64xf32>
    %189 = arith.truncf %188 : vector<16x64xf32> to vector<16x64xbf16>
    %c0_66 = arith.constant 0 : index
    %c0_67 = arith.constant 0 : index
    %c0_68 = arith.constant 0 : index
    %190 = vector.load %arg6[%c0_66, %c0_67, %c0_68] : memref<2x64x32xbf16, #tpu.memory_space<vmem>>, vector<1x64x32xbf16>
    %191 = vector.shape_cast %190 : vector<1x64x32xbf16> to vector<64x32xbf16>
    %cst_69 = arith.constant dense<0.000000e+00> : vector<16x32xf32>
    %192 = tpu.matmul %189, %191, %cst_69 {dimension_numbers = #tpu.dot_dimension_numbers<[1], [0], [0], [1], [0, 0, 1, 1], [], []>} : vector<16x64xbf16>, vector<64x32xbf16>, vector<16x32xf32> -> vector<16x32xf32>
    %c45 = arith.constant 45 : index
    %c0_70 = arith.constant 0 : index
    %193 = vector.load %arg7[%c45, %c0_70] : memref<56x128xf32, #tpu.memory_space<vmem>>, vector<1x32xf32>
    %194 = vector.broadcast %193 : vector<1x32xf32> to vector<16x32xf32>
    %195 = arith.addf %192, %194 : vector<16x32xf32>
    %196 = arith.addf %141, %195 : vector<16x32xf32>
    %c46 = arith.constant 46 : index
    %c0_71 = arith.constant 0 : index
    %197 = vector.load %arg7[%c46, %c0_71] : memref<56x128xf32, #tpu.memory_space<vmem>>, vector<1x32xf32>
    %c47 = arith.constant 47 : index
    %c0_72 = arith.constant 0 : index
    %198 = vector.load %arg7[%c47, %c0_72] : memref<56x128xf32, #tpu.memory_space<vmem>>, vector<1x32xf32>
    %cst_73 = arith.constant dense<0.000000e+00> : vector<16xf32>
    %199 = vector.multi_reduction <add>, %196, %cst_73 [1] : vector<16x32xf32> to vector<16xf32>
    %200 = vector.shape_cast %199 : vector<16xf32> to vector<16x1xf32>
    %cst_74 = arith.constant 3.200000e+01 : f32
    %201 = vector.broadcast %cst_74 : f32 to vector<16x1xf32>
    %202 = arith.divf %200, %201 : vector<16x1xf32>
    %203 = vector.broadcast %202 : vector<16x1xf32> to vector<16x32xf32>
    %204 = arith.subf %196, %203 : vector<16x32xf32>
    %205 = arith.mulf %204, %204 : vector<16x32xf32>
    %cst_75 = arith.constant dense<0.000000e+00> : vector<16xf32>
    %206 = vector.multi_reduction <add>, %205, %cst_75 [1] : vector<16x32xf32> to vector<16xf32>
    %207 = vector.shape_cast %206 : vector<16xf32> to vector<16x1xf32>
    %cst_76 = arith.constant 3.200000e+01 : f32
    %208 = vector.broadcast %cst_76 : f32 to vector<16x1xf32>
    %209 = arith.divf %207, %208 : vector<16x1xf32>
    %210 = vector.broadcast %202 : vector<16x1xf32> to vector<16x32xf32>
    %211 = arith.subf %196, %210 : vector<16x32xf32>
    %cst_77 = arith.constant 9.99999996E-13 : f32
    %212 = vector.broadcast %cst_77 : f32 to vector<16x1xf32>
    %213 = arith.addf %209, %212 : vector<16x1xf32>
    %214 = math.rsqrt %213 : vector<16x1xf32>
    %215 = vector.broadcast %214 : vector<16x1xf32> to vector<16x32xf32>
    %216 = arith.mulf %211, %215 : vector<16x32xf32>
    %217 = vector.broadcast %197 : vector<1x32xf32> to vector<16x32xf32>
    %218 = arith.mulf %216, %217 : vector<16x32xf32>
    %219 = vector.broadcast %198 : vector<1x32xf32> to vector<16x32xf32>
    %220 = arith.addf %218, %219 : vector<16x32xf32>
    %221 = arith.truncf %220 : vector<16x32xf32> to vector<16x32xbf16>
    %c1 = arith.constant 1 : index
    %c0_78 = arith.constant 0 : index
    %c0_79 = arith.constant 0 : index
    %222 = vector.load %arg3[%c1, %c0_78, %c0_79] : memref<2x32x96xbf16, #tpu.memory_space<vmem>>, vector<1x32x96xbf16>
    %223 = vector.shape_cast %222 : vector<1x32x96xbf16> to vector<32x96xbf16>
    %cst_80 = arith.constant dense<0.000000e+00> : vector<16x96xf32>
    %224 = tpu.matmul %221, %223, %cst_80 {dimension_numbers = #tpu.dot_dimension_numbers<[1], [0], [0], [1], [0, 0, 1, 1], [], []>} : vector<16x32xbf16>, vector<32x96xbf16>, vector<16x96xf32> -> vector<16x96xf32>
    %c48 = arith.constant 48 : index
    %c0_81 = arith.constant 0 : index
    %225 = vector.load %arg7[%c48, %c0_81] : memref<56x128xf32, #tpu.memory_space<vmem>>, vector<1x96xf32>
    %226 = vector.broadcast %225 : vector<1x96xf32> to vector<16x96xf32>
    %227 = arith.addf %224, %226 : vector<16x96xf32>
    %228 = vector.extract_strided_slice %227 {offsets = [0, 0], sizes = [16, 8], strides = [1, 1]} : vector<16x96xf32> to vector<16x8xf32>
    %229 = vector.extract_strided_slice %227 {offsets = [0, 32], sizes = [16, 8], strides = [1, 1]} : vector<16x96xf32> to vector<16x8xf32>
    %230 = vector.extract_strided_slice %227 {offsets = [0, 64], sizes = [16, 8], strides = [1, 1]} : vector<16x96xf32> to vector<16x8xf32>
    %231 = tpu.transpose %229, [1, 0] : vector<16x8xf32> -> vector<8x16xf32>
    %cst_82 = arith.constant dense<0.000000e+00> : vector<16x16xf32>
    %232 = tpu.matmul %228, %231, %cst_82 {dimension_numbers = #tpu.dot_dimension_numbers<[1], [0], [0], [1], [0, 0, 1, 1], [], []>} : vector<16x8xf32>, vector<8x16xf32>, vector<16x16xf32> -> vector<16x16xf32>
    %cst_83 = arith.constant 0.353553385 : f32
    %233 = vector.broadcast %cst_83 : f32 to vector<16x16xf32>
    %234 = arith.mulf %232, %233 : vector<16x16xf32>
    %235 = arith.addf %234, %25 : vector<16x16xf32>
    %cst_84 = arith.constant dense<0xFF800000> : vector<16xf32>
    %236 = vector.multi_reduction <maximumf>, %235, %cst_84 [1] : vector<16x16xf32> to vector<16xf32>
    %237 = vector.shape_cast %236 : vector<16xf32> to vector<16x1xf32>
    %238 = vector.broadcast %237 : vector<16x1xf32> to vector<16x16xf32>
    %239 = arith.subf %235, %238 : vector<16x16xf32>
    %240 = math.exp %239 : vector<16x16xf32>
    %cst_85 = arith.constant dense<0.000000e+00> : vector<16xf32>
    %241 = vector.multi_reduction <add>, %240, %cst_85 [1] : vector<16x16xf32> to vector<16xf32>
    %242 = vector.shape_cast %241 : vector<16xf32> to vector<16x1xf32>
    %243 = tpu.reciprocal %242 {approx = true} : vector<16x1xf32> -> vector<16x1xf32>
    %244 = vector.broadcast %243 : vector<16x1xf32> to vector<16x16xf32>
    %245 = arith.mulf %240, %244 : vector<16x16xf32>
    %cst_86 = arith.constant dense<0.000000e+00> : vector<16x8xf32>
    %246 = tpu.matmul %245, %230, %cst_86 {dimension_numbers = #tpu.dot_dimension_numbers<[1], [0], [0], [1], [0, 0, 1, 1], [], []>} : vector<16x16xf32>, vector<16x8xf32>, vector<16x8xf32> -> vector<16x8xf32>
    %247 = vector.extract_strided_slice %227 {offsets = [0, 8], sizes = [16, 8], strides = [1, 1]} : vector<16x96xf32> to vector<16x8xf32>
    %248 = vector.extract_strided_slice %227 {offsets = [0, 40], sizes = [16, 8], strides = [1, 1]} : vector<16x96xf32> to vector<16x8xf32>
    %249 = vector.extract_strided_slice %227 {offsets = [0, 72], sizes = [16, 8], strides = [1, 1]} : vector<16x96xf32> to vector<16x8xf32>
    %250 = tpu.transpose %248, [1, 0] : vector<16x8xf32> -> vector<8x16xf32>
    %cst_87 = arith.constant dense<0.000000e+00> : vector<16x16xf32>
    %251 = tpu.matmul %247, %250, %cst_87 {dimension_numbers = #tpu.dot_dimension_numbers<[1], [0], [0], [1], [0, 0, 1, 1], [], []>} : vector<16x8xf32>, vector<8x16xf32>, vector<16x16xf32> -> vector<16x16xf32>
    %cst_88 = arith.constant 0.353553385 : f32
    %252 = vector.broadcast %cst_88 : f32 to vector<16x16xf32>
    %253 = arith.mulf %251, %252 : vector<16x16xf32>
    %254 = arith.addf %253, %25 : vector<16x16xf32>
    %cst_89 = arith.constant dense<0xFF800000> : vector<16xf32>
    %255 = vector.multi_reduction <maximumf>, %254, %cst_89 [1] : vector<16x16xf32> to vector<16xf32>
    %256 = vector.shape_cast %255 : vector<16xf32> to vector<16x1xf32>
    %257 = vector.broadcast %256 : vector<16x1xf32> to vector<16x16xf32>
    %258 = arith.subf %254, %257 : vector<16x16xf32>
    %259 = math.exp %258 : vector<16x16xf32>
    %cst_90 = arith.constant dense<0.000000e+00> : vector<16xf32>
    %260 = vector.multi_reduction <add>, %259, %cst_90 [1] : vector<16x16xf32> to vector<16xf32>
    %261 = vector.shape_cast %260 : vector<16xf32> to vector<16x1xf32>
    %262 = tpu.reciprocal %261 {approx = true} : vector<16x1xf32> -> vector<16x1xf32>
    %263 = vector.broadcast %262 : vector<16x1xf32> to vector<16x16xf32>
    %264 = arith.mulf %259, %263 : vector<16x16xf32>
    %cst_91 = arith.constant dense<0.000000e+00> : vector<16x8xf32>
    %265 = tpu.matmul %264, %249, %cst_91 {dimension_numbers = #tpu.dot_dimension_numbers<[1], [0], [0], [1], [0, 0, 1, 1], [], []>} : vector<16x16xf32>, vector<16x8xf32>, vector<16x8xf32> -> vector<16x8xf32>
    %266 = vector.extract_strided_slice %227 {offsets = [0, 16], sizes = [16, 8], strides = [1, 1]} : vector<16x96xf32> to vector<16x8xf32>
    %267 = vector.extract_strided_slice %227 {offsets = [0, 48], sizes = [16, 8], strides = [1, 1]} : vector<16x96xf32> to vector<16x8xf32>
    %268 = vector.extract_strided_slice %227 {offsets = [0, 80], sizes = [16, 8], strides = [1, 1]} : vector<16x96xf32> to vector<16x8xf32>
    %269 = tpu.transpose %267, [1, 0] : vector<16x8xf32> -> vector<8x16xf32>
    %cst_92 = arith.constant dense<0.000000e+00> : vector<16x16xf32>
    %270 = tpu.matmul %266, %269, %cst_92 {dimension_numbers = #tpu.dot_dimension_numbers<[1], [0], [0], [1], [0, 0, 1, 1], [], []>} : vector<16x8xf32>, vector<8x16xf32>, vector<16x16xf32> -> vector<16x16xf32>
    %cst_93 = arith.constant 0.353553385 : f32
    %271 = vector.broadcast %cst_93 : f32 to vector<16x16xf32>
    %272 = arith.mulf %270, %271 : vector<16x16xf32>
    %273 = arith.addf %272, %25 : vector<16x16xf32>
    %cst_94 = arith.constant dense<0xFF800000> : vector<16xf32>
    %274 = vector.multi_reduction <maximumf>, %273, %cst_94 [1] : vector<16x16xf32> to vector<16xf32>
    %275 = vector.shape_cast %274 : vector<16xf32> to vector<16x1xf32>
    %276 = vector.broadcast %275 : vector<16x1xf32> to vector<16x16xf32>
    %277 = arith.subf %273, %276 : vector<16x16xf32>
    %278 = math.exp %277 : vector<16x16xf32>
    %cst_95 = arith.constant dense<0.000000e+00> : vector<16xf32>
    %279 = vector.multi_reduction <add>, %278, %cst_95 [1] : vector<16x16xf32> to vector<16xf32>
    %280 = vector.shape_cast %279 : vector<16xf32> to vector<16x1xf32>
    %281 = tpu.reciprocal %280 {approx = true} : vector<16x1xf32> -> vector<16x1xf32>
    %282 = vector.broadcast %281 : vector<16x1xf32> to vector<16x16xf32>
    %283 = arith.mulf %278, %282 : vector<16x16xf32>
    %cst_96 = arith.constant dense<0.000000e+00> : vector<16x8xf32>
    %284 = tpu.matmul %283, %268, %cst_96 {dimension_numbers = #tpu.dot_dimension_numbers<[1], [0], [0], [1], [0, 0, 1, 1], [], []>} : vector<16x16xf32>, vector<16x8xf32>, vector<16x8xf32> -> vector<16x8xf32>
    %285 = vector.extract_strided_slice %227 {offsets = [0, 24], sizes = [16, 8], strides = [1, 1]} : vector<16x96xf32> to vector<16x8xf32>
    %286 = vector.extract_strided_slice %227 {offsets = [0, 56], sizes = [16, 8], strides = [1, 1]} : vector<16x96xf32> to vector<16x8xf32>
    %287 = vector.extract_strided_slice %227 {offsets = [0, 88], sizes = [16, 8], strides = [1, 1]} : vector<16x96xf32> to vector<16x8xf32>
    %288 = tpu.transpose %286, [1, 0] : vector<16x8xf32> -> vector<8x16xf32>
    %cst_97 = arith.constant dense<0.000000e+00> : vector<16x16xf32>
    %289 = tpu.matmul %285, %288, %cst_97 {dimension_numbers = #tpu.dot_dimension_numbers<[1], [0], [0], [1], [0, 0, 1, 1], [], []>} : vector<16x8xf32>, vector<8x16xf32>, vector<16x16xf32> -> vector<16x16xf32>
    %cst_98 = arith.constant 0.353553385 : f32
    %290 = vector.broadcast %cst_98 : f32 to vector<16x16xf32>
    %291 = arith.mulf %289, %290 : vector<16x16xf32>
    %292 = arith.addf %291, %25 : vector<16x16xf32>
    %cst_99 = arith.constant dense<0xFF800000> : vector<16xf32>
    %293 = vector.multi_reduction <maximumf>, %292, %cst_99 [1] : vector<16x16xf32> to vector<16xf32>
    %294 = vector.shape_cast %293 : vector<16xf32> to vector<16x1xf32>
    %295 = vector.broadcast %294 : vector<16x1xf32> to vector<16x16xf32>
    %296 = arith.subf %292, %295 : vector<16x16xf32>
    %297 = math.exp %296 : vector<16x16xf32>
    %cst_100 = arith.constant dense<0.000000e+00> : vector<16xf32>
    %298 = vector.multi_reduction <add>, %297, %cst_100 [1] : vector<16x16xf32> to vector<16xf32>
    %299 = vector.shape_cast %298 : vector<16xf32> to vector<16x1xf32>
    %300 = tpu.reciprocal %299 {approx = true} : vector<16x1xf32> -> vector<16x1xf32>
    %301 = vector.broadcast %300 : vector<16x1xf32> to vector<16x16xf32>
    %302 = arith.mulf %297, %301 : vector<16x16xf32>
    %cst_101 = arith.constant dense<0.000000e+00> : vector<16x8xf32>
    %303 = tpu.matmul %302, %287, %cst_101 {dimension_numbers = #tpu.dot_dimension_numbers<[1], [0], [0], [1], [0, 0, 1, 1], [], []>} : vector<16x16xf32>, vector<16x8xf32>, vector<16x8xf32> -> vector<16x8xf32>
    %304 = tpu.concatenate %246, %265, %284, %303 in 1 : vector<16x8xf32>, vector<16x8xf32>, vector<16x8xf32>, vector<16x8xf32> -> vector<16x32xf32>
    %305 = arith.truncf %304 : vector<16x32xf32> to vector<16x32xbf16>
    %c1_102 = arith.constant 1 : index
    %c0_103 = arith.constant 0 : index
    %c0_104 = arith.constant 0 : index
    %306 = vector.load %arg4[%c1_102, %c0_103, %c0_104] : memref<2x32x32xbf16, #tpu.memory_space<vmem>>, vector<1x32x32xbf16>
    %307 = vector.shape_cast %306 : vector<1x32x32xbf16> to vector<32x32xbf16>
    %cst_105 = arith.constant dense<0.000000e+00> : vector<16x32xf32>
    %308 = tpu.matmul %305, %307, %cst_105 {dimension_numbers = #tpu.dot_dimension_numbers<[1], [0], [0], [1], [0, 0, 1, 1], [], []>} : vector<16x32xbf16>, vector<32x32xbf16>, vector<16x32xf32> -> vector<16x32xf32>
    %c49 = arith.constant 49 : index
    %c0_106 = arith.constant 0 : index
    %309 = vector.load %arg7[%c49, %c0_106] : memref<56x128xf32, #tpu.memory_space<vmem>>, vector<1x32xf32>
    %310 = vector.broadcast %309 : vector<1x32xf32> to vector<16x32xf32>
    %311 = arith.addf %308, %310 : vector<16x32xf32>
    %312 = arith.addf %220, %311 : vector<16x32xf32>
    %c50 = arith.constant 50 : index
    %c0_107 = arith.constant 0 : index
    %313 = vector.load %arg7[%c50, %c0_107] : memref<56x128xf32, #tpu.memory_space<vmem>>, vector<1x32xf32>
    %c51 = arith.constant 51 : index
    %c0_108 = arith.constant 0 : index
    %314 = vector.load %arg7[%c51, %c0_108] : memref<56x128xf32, #tpu.memory_space<vmem>>, vector<1x32xf32>
    %cst_109 = arith.constant dense<0.000000e+00> : vector<16xf32>
    %315 = vector.multi_reduction <add>, %312, %cst_109 [1] : vector<16x32xf32> to vector<16xf32>
    %316 = vector.shape_cast %315 : vector<16xf32> to vector<16x1xf32>
    %cst_110 = arith.constant 3.200000e+01 : f32
    %317 = vector.broadcast %cst_110 : f32 to vector<16x1xf32>
    %318 = arith.divf %316, %317 : vector<16x1xf32>
    %319 = vector.broadcast %318 : vector<16x1xf32> to vector<16x32xf32>
    %320 = arith.subf %312, %319 : vector<16x32xf32>
    %321 = arith.mulf %320, %320 : vector<16x32xf32>
    %cst_111 = arith.constant dense<0.000000e+00> : vector<16xf32>
    %322 = vector.multi_reduction <add>, %321, %cst_111 [1] : vector<16x32xf32> to vector<16xf32>
    %323 = vector.shape_cast %322 : vector<16xf32> to vector<16x1xf32>
    %cst_112 = arith.constant 3.200000e+01 : f32
    %324 = vector.broadcast %cst_112 : f32 to vector<16x1xf32>
    %325 = arith.divf %323, %324 : vector<16x1xf32>
    %326 = vector.broadcast %318 : vector<16x1xf32> to vector<16x32xf32>
    %327 = arith.subf %312, %326 : vector<16x32xf32>
    %cst_113 = arith.constant 9.99999996E-13 : f32
    %328 = vector.broadcast %cst_113 : f32 to vector<16x1xf32>
    %329 = arith.addf %325, %328 : vector<16x1xf32>
    %330 = math.rsqrt %329 : vector<16x1xf32>
    %331 = vector.broadcast %330 : vector<16x1xf32> to vector<16x32xf32>
    %332 = arith.mulf %327, %331 : vector<16x32xf32>
    %333 = vector.broadcast %313 : vector<1x32xf32> to vector<16x32xf32>
    %334 = arith.mulf %332, %333 : vector<16x32xf32>
    %335 = vector.broadcast %314 : vector<1x32xf32> to vector<16x32xf32>
    %336 = arith.addf %334, %335 : vector<16x32xf32>
    %337 = arith.truncf %336 : vector<16x32xf32> to vector<16x32xbf16>
    %c1_114 = arith.constant 1 : index
    %c0_115 = arith.constant 0 : index
    %c0_116 = arith.constant 0 : index
    %338 = vector.load %arg5[%c1_114, %c0_115, %c0_116] : memref<2x32x64xbf16, #tpu.memory_space<vmem>>, vector<1x32x64xbf16>
    %339 = vector.shape_cast %338 : vector<1x32x64xbf16> to vector<32x64xbf16>
    %cst_117 = arith.constant dense<0.000000e+00> : vector<16x64xf32>
    %340 = tpu.matmul %337, %339, %cst_117 {dimension_numbers = #tpu.dot_dimension_numbers<[1], [0], [0], [1], [0, 0, 1, 1], [], []>} : vector<16x32xbf16>, vector<32x64xbf16>, vector<16x64xf32> -> vector<16x64xf32>
    %c52 = arith.constant 52 : index
    %c0_118 = arith.constant 0 : index
    %341 = vector.load %arg7[%c52, %c0_118] : memref<56x128xf32, #tpu.memory_space<vmem>>, vector<1x64xf32>
    %342 = vector.broadcast %341 : vector<1x64xf32> to vector<16x64xf32>
    %343 = arith.addf %340, %342 : vector<16x64xf32>
    %cst_119 = arith.constant 5.000000e-01 : f32
    %344 = vector.broadcast %cst_119 : f32 to vector<16x64xf32>
    %345 = arith.mulf %344, %343 : vector<16x64xf32>
    %cst_120 = arith.constant 0.707106769 : f32
    %346 = vector.broadcast %cst_120 : f32 to vector<16x64xf32>
    %347 = arith.mulf %343, %346 : vector<16x64xf32>
    %cst_121 = arith.constant 0.000000e+00 : f32
    %348 = vector.broadcast %cst_121 : f32 to vector<16x64xf32>
    %349 = arith.cmpf oge, %347, %348 : vector<16x64xf32>
    %cst_122 = arith.constant 1.000000e+00 : f32
    %cst_123 = arith.constant -1.000000e+00 : f32
    %350 = vector.broadcast %cst_122 : f32 to vector<16x64xf32>
    %351 = vector.broadcast %cst_123 : f32 to vector<16x64xf32>
    %352 = arith.select %349, %350, %351 : vector<16x64xi1>, vector<16x64xf32>
    %353 = math.absf %347 : vector<16x64xf32>
    %cst_124 = arith.constant 0.327591091 : f32
    %354 = vector.broadcast %cst_124 : f32 to vector<16x64xf32>
    %355 = arith.mulf %354, %353 : vector<16x64xf32>
    %cst_125 = arith.constant 1.000000e+00 : f32
    %356 = vector.broadcast %cst_125 : f32 to vector<16x64xf32>
    %357 = arith.addf %356, %355 : vector<16x64xf32>
    %358 = tpu.reciprocal %357 : vector<16x64xf32> -> vector<16x64xf32>
    %cst_126 = arith.constant 1.06140542 : f32
    %359 = vector.broadcast %cst_126 : f32 to vector<16x64xf32>
    %360 = arith.mulf %359, %358 : vector<16x64xf32>
    %cst_127 = arith.constant -1.45315206 : f32
    %361 = vector.broadcast %cst_127 : f32 to vector<16x64xf32>
    %362 = arith.addf %360, %361 : vector<16x64xf32>
    %363 = arith.mulf %362, %358 : vector<16x64xf32>
    %cst_128 = arith.constant 1.42141378 : f32
    %364 = vector.broadcast %cst_128 : f32 to vector<16x64xf32>
    %365 = arith.addf %363, %364 : vector<16x64xf32>
    %366 = arith.mulf %365, %358 : vector<16x64xf32>
    %cst_129 = arith.constant -0.284496725 : f32
    %367 = vector.broadcast %cst_129 : f32 to vector<16x64xf32>
    %368 = arith.addf %366, %367 : vector<16x64xf32>
    %369 = arith.mulf %368, %358 : vector<16x64xf32>
    %cst_130 = arith.constant 0.254829586 : f32
    %370 = vector.broadcast %cst_130 : f32 to vector<16x64xf32>
    %371 = arith.addf %369, %370 : vector<16x64xf32>
    %372 = arith.mulf %371, %358 : vector<16x64xf32>
    %373 = arith.mulf %353, %353 : vector<16x64xf32>
    %cst_131 = arith.constant 0.000000e+00 : f32
    %374 = vector.broadcast %cst_131 : f32 to vector<16x64xf32>
    %375 = arith.subf %374, %373 : vector<16x64xf32>
    %376 = math.exp %375 : vector<16x64xf32>
    %377 = arith.mulf %372, %376 : vector<16x64xf32>
    %cst_132 = arith.constant 1.000000e+00 : f32
    %378 = vector.broadcast %cst_132 : f32 to vector<16x64xf32>
    %379 = arith.subf %378, %377 : vector<16x64xf32>
    %380 = arith.mulf %352, %379 : vector<16x64xf32>
    %cst_133 = arith.constant 1.000000e+00 : f32
    %381 = vector.broadcast %cst_133 : f32 to vector<16x64xf32>
    %382 = arith.addf %381, %380 : vector<16x64xf32>
    %383 = arith.mulf %345, %382 : vector<16x64xf32>
    %384 = arith.truncf %383 : vector<16x64xf32> to vector<16x64xbf16>
    %c1_134 = arith.constant 1 : index
    %c0_135 = arith.constant 0 : index
    %c0_136 = arith.constant 0 : index
    %385 = vector.load %arg6[%c1_134, %c0_135, %c0_136] : memref<2x64x32xbf16, #tpu.memory_space<vmem>>, vector<1x64x32xbf16>
    %386 = vector.shape_cast %385 : vector<1x64x32xbf16> to vector<64x32xbf16>
    %cst_137 = arith.constant dense<0.000000e+00> : vector<16x32xf32>
    %387 = tpu.matmul %384, %386, %cst_137 {dimension_numbers = #tpu.dot_dimension_numbers<[1], [0], [0], [1], [0, 0, 1, 1], [], []>} : vector<16x64xbf16>, vector<64x32xbf16>, vector<16x32xf32> -> vector<16x32xf32>
    %c53 = arith.constant 53 : index
    %c0_138 = arith.constant 0 : index
    %388 = vector.load %arg7[%c53, %c0_138] : memref<56x128xf32, #tpu.memory_space<vmem>>, vector<1x32xf32>
    %389 = vector.broadcast %388 : vector<1x32xf32> to vector<16x32xf32>
    %390 = arith.addf %387, %389 : vector<16x32xf32>
    %391 = arith.addf %336, %390 : vector<16x32xf32>
    %c54 = arith.constant 54 : index
    %c0_139 = arith.constant 0 : index
    %392 = vector.load %arg7[%c54, %c0_139] : memref<56x128xf32, #tpu.memory_space<vmem>>, vector<1x32xf32>
    %c55 = arith.constant 55 : index
    %c0_140 = arith.constant 0 : index
    %393 = vector.load %arg7[%c55, %c0_140] : memref<56x128xf32, #tpu.memory_space<vmem>>, vector<1x32xf32>
    %cst_141 = arith.constant dense<0.000000e+00> : vector<16xf32>
    %394 = vector.multi_reduction <add>, %391, %cst_141 [1] : vector<16x32xf32> to vector<16xf32>
    %395 = vector.shape_cast %394 : vector<16xf32> to vector<16x1xf32>
    %cst_142 = arith.constant 3.200000e+01 : f32
    %396 = vector.broadcast %cst_142 : f32 to vector<16x1xf32>
    %397 = arith.divf %395, %396 : vector<16x1xf32>
    %398 = vector.broadcast %397 : vector<16x1xf32> to vector<16x32xf32>
    %399 = arith.subf %391, %398 : vector<16x32xf32>
    %400 = arith.mulf %399, %399 : vector<16x32xf32>
    %cst_143 = arith.constant dense<0.000000e+00> : vector<16xf32>
    %401 = vector.multi_reduction <add>, %400, %cst_143 [1] : vector<16x32xf32> to vector<16xf32>
    %402 = vector.shape_cast %401 : vector<16xf32> to vector<16x1xf32>
    %cst_144 = arith.constant 3.200000e+01 : f32
    %403 = vector.broadcast %cst_144 : f32 to vector<16x1xf32>
    %404 = arith.divf %402, %403 : vector<16x1xf32>
    %405 = vector.broadcast %397 : vector<16x1xf32> to vector<16x32xf32>
    %406 = arith.subf %391, %405 : vector<16x32xf32>
    %cst_145 = arith.constant 9.99999996E-13 : f32
    %407 = vector.broadcast %cst_145 : f32 to vector<16x1xf32>
    %408 = arith.addf %404, %407 : vector<16x1xf32>
    %409 = math.rsqrt %408 : vector<16x1xf32>
    %410 = vector.broadcast %409 : vector<16x1xf32> to vector<16x32xf32>
    %411 = arith.mulf %406, %410 : vector<16x32xf32>
    %412 = vector.broadcast %392 : vector<1x32xf32> to vector<16x32xf32>
    %413 = arith.mulf %411, %412 : vector<16x32xf32>
    %414 = vector.broadcast %393 : vector<1x32xf32> to vector<16x32xf32>
    %415 = arith.addf %413, %414 : vector<16x32xf32>
    %c0_146 = arith.constant 0 : index
    %c0_147 = arith.constant 0 : index
    %416 = vector.load %arg7[%c0_146, %c0_147] : memref<56x128xf32, #tpu.memory_space<vmem>>, vector<32x128xf32>
    %c32 = arith.constant 32 : index
    %c0_148 = arith.constant 0 : index
    %417 = vector.load %arg7[%c32, %c0_148] : memref<56x128xf32, #tpu.memory_space<vmem>>, vector<4x128xf32>
    %c36 = arith.constant 36 : index
    %c0_149 = arith.constant 0 : index
    %418 = vector.load %arg7[%c36, %c0_149] : memref<56x128xf32, #tpu.memory_space<vmem>>, vector<1x128xf32>
    %cst_150 = arith.constant dense<0.000000e+00> : vector<16x128xf32>
    %419 = tpu.matmul %415, %416, %cst_150 {dimension_numbers = #tpu.dot_dimension_numbers<[1], [0], [0], [1], [0, 0, 1, 1], [], []>} : vector<16x32xf32>, vector<32x128xf32>, vector<16x128xf32> -> vector<16x128xf32>
    %c0_151 = arith.constant 0 : index
    %c0_152 = arith.constant 0 : index
    %420 = vector.load %arg2[%c0_151, %c0_152] : memref<16x4xf32, #tpu.memory_space<vmem>>, vector<16x4xf32>
    %cst_153 = arith.constant dense<0.000000e+00> : vector<16x128xf32>
    %421 = tpu.matmul %420, %417, %cst_153 {dimension_numbers = #tpu.dot_dimension_numbers<[1], [0], [0], [1], [0, 0, 1, 1], [], []>} : vector<16x4xf32>, vector<4x128xf32>, vector<16x128xf32> -> vector<16x128xf32>
    %422 = arith.addf %419, %421 : vector<16x128xf32>
    %423 = vector.broadcast %418 : vector<1x128xf32> to vector<16x128xf32>
    %424 = arith.addf %422, %423 : vector<16x128xf32>
    %c0_154 = arith.constant 0 : index
    %c0_155 = arith.constant 0 : index
    %425 = vector.load %arg8[%c0_154, %c0_155] : memref<16x128xf32, #tpu.memory_space<vmem>>, vector<16x128xf32>
    tpu.vector_store %arg8[%c0_154, %c0_155], %424 {strides = array<i32>} : memref<16x128xf32, #tpu.memory_space<vmem>>, vector<16x128xf32>,
    return
  }
}

</mosaic_0001>

<llo_original>
// kernel: mul.8
$region0: #{mul.8}
  %s0 = inlined_call_operand.vmem [shape: f32[2,8], index: 0, kind: input, shape index: {}]
  %s1 = inlined_call_operand.vmem [shape: f32[16], index: 1, kind: output, shape index: {}]
  $region1: #{mul.8} parent=0
    #allocation0 [shape = 'u8[4096]{0}', space=vmem, size = 0x1000, scoped, tag = 'scoped mem for output reshape']
    #allocation1 [shape = 'u8[4096]{0}', space=vmem, size = 0x1000, scoped, tag = 'scoped mem for input reshape']
    %s3 = ssub.s32 4, 1
    %v4 = vld [vmem:[%s0] sm:%s3]
    %5 = vst [vmem:[#allocation1] sm:%s3] %v4
    %v6 = vld [vmem:[#allocation1] sm:$0x1]
    %vm7 = vcmask 64512
    %8 = vst.msk [vmem:[#allocation0] sm:$0x1] %vm7, %v6
    %s9 = scalar_lea.vmem [#allocation1], 1
    %v10 = vld [vmem:[%s9] sm:$0x1]
    %11 = vrot.lane.b32.xlu0 %v10, 8
    %v12 = vpop.permute.xlu0 %11
    %vm13 = vcmask 130112
    %14 = vst.msk [vmem:[#allocation0] sm:$0x1] %vm13, %v12
    %s16 = ssub.s32 2, 1
    %v17 = vld [vmem:[#allocation0] sm:%s16]
    %s19 = ssub.s32 2, 1
    %20 = vst [vmem:[%s1] sm:%s19] %v17

// kernel: forward.1
$region0: #{forward.1}
  #allocation0 [shape = 'u32[]', space=smem, size = 0x4, offset = 0x4, fixed_abs, tag = 'smem constant byte address 0x4 - core index']
  #allocation1 [shape = 'u32[72,128]{1,0:T(1,128)}', space=vmem, size = 0x9000, scoped, tag = 'internal scratch']
  %s0 = inlined_call_operand.vmem [shape: f32[16,32], index: 0, kind: input, shape index: {}]
  %s1 = inlined_call_operand.vmem [shape: f32[16,16], index: 1, kind: input, shape index: {}]
  %s2 = inlined_call_operand.vmem [shape: f32[16,4], index: 2, kind: input, shape index: {}]
  %s3 = inlined_call_operand.vmem [shape: bf16[2,32,96], index: 3, kind: input, shape index: {}]
  %s4 = inlined_call_operand.vmem [shape: bf16[2,32,32], index: 4, kind: input, shape index: {}]
  %s5 = inlined_call_operand.vmem [shape: bf16[2,32,64], index: 5, kind: input, shape index: {}]
  %s6 = inlined_call_operand.vmem [shape: bf16[2,64,32], index: 6, kind: input, shape index: {}]
  %s7 = inlined_call_operand.vmem [shape: f32[56,128], index: 7, kind: input, shape index: {}]
  %s8 = inlined_call_operand.vmem [shape: f32[16,128], index: 8, kind: output, shape index: {}]
  %s9 = sld [smem:[#allocation0]]
  $region42: #{forward.1} parent=0
    _
  %s11 = ssub.s32 1, %s9
  %s12 = scalar_select 0, %s11, %s9
  // Predicated region
  $region2: #{forward.1} parent=0 // pred_check
    _
  $region3: #{forward.1} parent=0 // pred_check_branch
    %14 = sbr.rel (0) target = $region5
  $region4: #{forward.1} parent=0 // pred_region
    _
  $region5: #{forward.1} parent=0 // pred_fallthru
    _
  // Predicated region
  $region6: #{forward.1} parent=0 // pred_check
    _
  $region7: #{forward.1} parent=0 // pred_check_branch
    %16 = sbr.rel (0) target = $region9
  $region8: #{forward.1} parent=0 // pred_region
    _
  $region9: #{forward.1} parent=0 // pred_fallthru
    _
  // Predicated region
  $region10: #{forward.1} parent=0 // pred_check
    _
  $region11: #{forward.1} parent=0 // pred_check_branch
    %18 = sbr.rel (0) target = $region13
  $region12: #{forward.1} parent=0 // pred_region
    _
  $region13: #{forward.1} parent=0 // pred_fallthru
    _
  // Predicated region
  $region14: #{forward.1} parent=0 // pred_check
    _
  $region15: #{forward.1} parent=0 // pred_check_branch
    %20 = sbr.rel (0) target = $region17
  $region16: #{forward.1} parent=0 // pred_region
    _
  $region17: #{forward.1} parent=0 // pred_fallthru
    _
  // Predicated region
  $region18: #{forward.1} parent=0 // pred_check
    _
  $region19: #{forward.1} parent=0 // pred_check_branch
    %22 = sbr.rel (0) target = $region21
  $region20: #{forward.1} parent=0 // pred_region
    _
  $region21: #{forward.1} parent=0 // pred_fallthru
    _
  // Predicated region
  $region22: #{forward.1} parent=0 // pred_check
    _
  $region23: #{forward.1} parent=0 // pred_check_branch
    %24 = sbr.rel (0) target = $region25
  $region24: #{forward.1} parent=0 // pred_region
    _
  $region25: #{forward.1} parent=0 // pred_fallthru
    _
  // Predicated region
  $region26: #{forward.1} parent=0 // pred_check
    _
  $region27: #{forward.1} parent=0 // pred_check_branch
    %26 = sbr.rel (0) target = $region29
  $region28: #{forward.1} parent=0 // pred_region
    _
  $region29: #{forward.1} parent=0 // pred_fallthru
    _
  // Predicated region
  $region30: #{forward.1} parent=0 // pred_check
    _
  $region31: #{forward.1} parent=0 // pred_check_branch
    %28 = sbr.rel (0) target = $region33
  $region32: #{forward.1} parent=0 // pred_region
    _
  $region33: #{forward.1} parent=0 // pred_fallthru
    _
  %v30 = vld [vmem:[%s0] sm:$0xff]
  %v31 = vld [vmem:[%s0 + $0x8] sm:$0xff]
  %v32 = vld [vmem:[%s7 + $0x25] sm:$0x1]
  %v33 = vld [vmem:[%s7 + $0x26] sm:$0x1]
  %vm34 = vcmask 261120
  %v35 = vsel %vm34, %v30, 0.0
  %36 = vadd.xlane.f32.xlu0 %v35
  %v37 = vpop.xlane.xlu0 %36
  %v38 = vsel %vm34, %v31, 0.0
  %39 = vadd.xlane.f32.xlu0 %v38
  %v40 = vpop.xlane.xlu0 %39
  %v41 = vrcp.pop 32.0
  %v42 = vmul.f32 32.0, %v41
  %v43 = vsub.f32 1.0, %v42
  %v44 = vmul.f32 %v41, %v43
  %v45 = vadd.f32 %v41, %v44
  %vm46 = vweird.f32 %v41
  %v47 = vsel %vm46, %v41, %v45
  %v48 = vmul.f32 %v37, %v47
  %v49 = vmul.f32 %v40, %v47
  %v50 = vsub.f32 %v30, %v48
  %v51 = vsub.f32 %v31, %v49
  %v52 = vmul.f32 %v50, %v50
  %v53 = vmul.f32 %v51, %v51
  %v54 = vsel %vm34, %v52, 0.0
  %55 = vadd.xlane.f32.xlu0 %v54
  %v56 = vpop.xlane.xlu0 %55
  %v57 = vsel %vm34, %v53, 0.0
  %58 = vadd.xlane.f32.xlu0 %v57
  %v59 = vpop.xlane.xlu0 %58
  %v60 = vmul.f32 %v56, %v47
  %v61 = vmul.f32 %v59, %v47
  %v62 = vadd.f32 %v60, 1e-12
  %v63 = vadd.f32 %v61, 1e-12
  %v64 = vrsqrt.pop %v62
  %v65 = vmul.f32 %v64, %v62
  %v66 = vmul.f32 %v65, %v64
  %v67 = vmul.f32 0.5, %v66
  %v68 = vsub.f32 1.5, %v67
  %v69 = vmul.f32 %v64, %v68
  %vm70 = vweird.f32 %v62
  %vm71 = vweird.f32 %v64
  %vm72 = vmor %vm70, %vm71
  %v73 = vsel %vm72, %v64, %v69
  %v74 = vrsqrt.pop %v63
  %v75 = vmul.f32 %v74, %v63
  %v76 = vmul.f32 %v75, %v74
  %v77 = vmul.f32 0.5, %v76
  %v78 = vsub.f32 1.5, %v77
  %v79 = vmul.f32 %v74, %v78
  %vm80 = vweird.f32 %v63
  %vm81 = vweird.f32 %v74
  %vm82 = vmor %vm80, %vm81
  %v83 = vsel %vm82, %v74, %v79
  %v84 = vmul.f32 %v50, %v73
  %v85 = vmul.f32 %v51, %v83
  %v86 = vperm.slane %v32, 0
  %v87 = vmul.f32 %v84, %v86
  %v88 = vmul.f32 %v85, %v86
  %v89 = vperm.slane %v33, 0
  %v90 = vadd.f32 %v87, %v89
  %v91 = vadd.f32 %v88, %v89
  %v92 = vld [vmem:[%s1] sm:$0xff]
  %v93 = vld [vmem:[%s1 + $0x8] sm:$0xff]
  %v94 = vpack.c.bf16 %v91, %v90
  %v95 = vld [vmem:[%s3] sm:$0xf]
  %v96 = vld [vmem:[%s3 + $0x4] sm:$0xf]
  %v97 = vld [vmem:[%s3 + $0x8] sm:$0xf]
  %v98 = vld [vmem:[%s3 + $0xc] sm:$0xf]
  %v99 = vld [vmem:[%s7 + $0x28] sm:$0x1]
  %v100 = vperm.slane %v99, 0
  %v105 = vunpack.c.l.b16 %v95
  %v106 = vunpack.c.l.b16 %v96
  %v107 = vunpack.c.l.b16 %v97
  %v108 = vunpack.c.l.b16 %v98
  %v109 = vpack.c.b16 %v106, %v105
  %v110 = vpack.c.b16 %v108, %v107
  %v114 = vsel %vm34, %v94, 0
  %116 = vmatpush.bf16.msra.mxu0 0
  %117 = vmatpush.bf16.msra.mxu0 0
  %118 = vmatpush.bf16.msra.mxu0 0
  %119 = vmatpush.bf16.msra.mxu0 0
  %120 = vmatpush.bf16.msra.mxu0 0
  %121 = vmatpush.bf16.msra.mxu0 0
  %122 = vmatpush.bf16.msra.mxu0 %v110
  %123 = vmatpush.bf16.msra.mxu0 %v109
  %124 = vmatmul.bf16.gmra.mxu0 %v114
  %v125 = vpop.f32.mrf.mxu0
  %v126 = vadd.f32 %v100, %v125
  %v127 = vpop.f32.mrf.mxu0
  %v128 = vadd.f32 %v100, %v127
  %129 = vdwg.mxu0
  %132 = vrot.lane.b32.xlu0 %v126, 96
  %v133 = vpop.permute.xlu0 %132
  %134 = vrot.lane.b32.xlu0 %v128, 96
  %v135 = vpop.permute.xlu0 %134
  %vm136 = vcmask 64512
  %v137 = vsel %vm136, %v126, 0
  %v139 = vsel %vm136, %v128, 0
  %v141 = vsel %vm136, %v133, 0
  %v143 = vsel %vm136, %v135, 0
  %145 = vmatpush.xpose.msra.mxu0 0.0
  %146 = vmatpush.xpose.msra.mxu0 0.0
  %147 = vmatpush.xpose.msra.mxu0 0.0
  %148 = vmatpush.xpose.msra.mxu0 0.0
  %149 = vmatpush.xpose.msra.mxu0 0.0
  %150 = vmatpush.xpose.msra.mxu0 0.0
  %151 = vmatpush.xpose.msra.mxu0 0.0
  %152 = vmatpush.xpose.msra.mxu0 0.0
  %153 = vmatpush.xpose.msra.mxu0 0.0
  %154 = vmatpush.xpose.msra.mxu0 0.0
  %155 = vmatpush.xpose.msra.mxu0 0.0
  %156 = vmatpush.xpose.msra.mxu0 0.0
  %157 = vmatpush.xpose.msra.mxu0 0.0
  %158 = vmatpush.xpose.msra.mxu0 0.0
  %159 = vmatpush.xpose.msra.mxu0 %v143
  %160 = vmatpush.xpose.msra.mxu0 %v141
  %161 = vmatmul.f32.gmra.mxu0 %v137
  %v162 = vpop.f32.mrf.mxu0
  %v163 = vadd.f32 0.0, %v162
  %164 = vmatmul.f32.gmra.mxu0 %v139
  %v165 = vpop.f32.mrf.mxu0
  %v166 = vadd.f32 0.0, %v165
  %167 = vdwg.mxu0
  %v168 = vmul.f32 %v163, 0.35355338
  %v169 = vmul.f32 %v166, 0.35355338
  %v170 = vadd.f32 %v168, %v92
  %v171 = vadd.f32 %v169, %v93
  %vm172 = vcmask 130048
  %v173 = vsel %vm172, %v170, -inf
  %174 = vmax.xlane.f32.xlu0 %v173
  %v175 = vpop.xlane.xlu0 %174
  %v176 = vsel %vm172, %v171, -inf
  %177 = vmax.xlane.f32.xlu0 %v176
  %v178 = vpop.xlane.xlu0 %177
  %v179 = vsub.f32 %v170, %v175
  %v180 = vsub.f32 %v171, %v178
  %v181 = vmul.f32 %v179, 1.442695
  %v182 = vpow.pop %v181
  %v183 = vmul.f32 %v180, 1.442695
  %v184 = vpow.pop %v183
  %v185 = vsel %vm172, %v182, 0.0
  %186 = vadd.xlane.f32.xlu0 %v185
  %v187 = vpop.xlane.xlu0 %186
  %v188 = vsel %vm172, %v184, 0.0
  %189 = vadd.xlane.f32.xlu0 %v188
  %v190 = vpop.xlane.xlu0 %189
  %v191 = vrcp.pop %v187
  %v192 = vrcp.pop %v190
  %v193 = vmul.f32 %v182, %v191
  %v194 = vmul.f32 %v184, %v192
  %195 = vrot.lane.b32.xlu0 %v126, 64
  %v196 = vpop.permute.xlu0 %195
  %197 = vrot.lane.b32.xlu0 %v128, 64
  %v198 = vpop.permute.xlu0 %197
  %v202 = vsel %vm172, %v193, 0
  %v205 = vsel %vm172, %v194, 0
  %207 = vmatpush.msra.mxu0 0.0
  %208 = vmatpush.msra.mxu0 0.0
  %209 = vmatpush.msra.mxu0 0.0
  %210 = vmatpush.msra.mxu0 0.0
  %211 = vmatpush.msra.mxu0 0.0
  %212 = vmatpush.msra.mxu0 0.0
  %213 = vmatpush.msra.mxu0 0.0
  %214 = vmatpush.msra.mxu0 0.0
  %215 = vmatpush.msra.mxu0 0.0
  %216 = vmatpush.msra.mxu0 0.0
  %217 = vmatpush.msra.mxu0 0.0
  %218 = vmatpush.msra.mxu0 0.0
  %219 = vmatpush.msra.mxu0 0.0
  %220 = vmatpush.msra.mxu0 0.0
  %221 = vmatpush.msra.mxu0 %v198
  %222 = vmatpush.msra.mxu0 %v196
  %223 = vmatmul.f32.gmra.mxu0 %v202
  %v224 = vpop.f32.mrf.mxu0
  %v225 = vadd.f32 0.0, %v224
  %226 = vmatmul.f32.gmra.mxu0 %v205
  %v227 = vpop.f32.mrf.mxu0
  %v228 = vadd.f32 0.0, %v227
  %229 = vdwg.mxu0
  %230 = vrot.lane.b32.xlu0 %v126, 120
  %v231 = vpop.permute.xlu0 %230
  %232 = vrot.lane.b32.xlu0 %v128, 120
  %v233 = vpop.permute.xlu0 %232
  %234 = vrot.lane.b32.xlu0 %v126, 88
  %v235 = vpop.permute.xlu0 %234
  %236 = vrot.lane.b32.xlu0 %v128, 88
  %v237 = vpop.permute.xlu0 %236
  %v238 = vsel %vm136, %v231, 0
  %v240 = vsel %vm136, %v233, 0
  %v242 = vsel %vm136, %v235, 0
  %v244 = vsel %vm136, %v237, 0
  %246 = vmatpush.xpose.msra.mxu0 0.0
  %247 = vmatpush.xpose.msra.mxu0 0.0
  %248 = vmatpush.xpose.msra.mxu0 0.0
  %249 = vmatpush.xpose.msra.mxu0 0.0
  %250 = vmatpush.xpose.msra.mxu0 0.0
  %251 = vmatpush.xpose.msra.mxu0 0.0
  %252 = vmatpush.xpose.msra.mxu0 0.0
  %253 = vmatpush.xpose.msra.mxu0 0.0
  %254 = vmatpush.xpose.msra.mxu0 0.0
  %255 = vmatpush.xpose.msra.mxu0 0.0
  %256 = vmatpush.xpose.msra.mxu0 0.0
  %257 = vmatpush.xpose.msra.mxu0 0.0
  %258 = vmatpush.xpose.msra.mxu0 0.0
  %259 = vmatpush.xpose.msra.mxu0 0.0
  %260 = vmatpush.xpose.msra.mxu0 %v244
  %261 = vmatpush.xpose.msra.mxu0 %v242
  %262 = vmatmul.f32.gmra.mxu0 %v238
  %v263 = vpop.f32.mrf.mxu0
  %v264 = vadd.f32 0.0, %v263
  %265 = vmatmul.f32.gmra.mxu0 %v240
  %v266 = vpop.f32.mrf.mxu0
  %v267 = vadd.f32 0.0, %v266
  %268 = vdwg.mxu0
  %v269 = vmul.f32 %v264, 0.35355338
  %v270 = vmul.f32 %v267, 0.35355338
  %v271 = vadd.f32 %v269, %v92
  %v272 = vadd.f32 %v270, %v93
  %v273 = vsel %vm172, %v271, -inf
  %274 = vmax.xlane.f32.xlu0 %v273
  %v275 = vpop.xlane.xlu0 %274
  %v276 = vsel %vm172, %v272, -inf
  %277 = vmax.xlane.f32.xlu0 %v276
  %v278 = vpop.xlane.xlu0 %277
  %v279 = vsub.f32 %v271, %v275
  %v280 = vsub.f32 %v272, %v278
  %v281 = vmul.f32 %v279, 1.442695
  %v282 = vpow.pop %v281
  %v283 = vmul.f32 %v280, 1.442695
  %v284 = vpow.pop %v283
  %v285 = vsel %vm172, %v282, 0.0
  %286 = vadd.xlane.f32.xlu0 %v285
  %v287 = vpop.xlane.xlu0 %286
  %v288 = vsel %vm172, %v284, 0.0
  %289 = vadd.xlane.f32.xlu0 %v288
  %v290 = vpop.xlane.xlu0 %289
  %v291 = vrcp.pop %v287
  %v292 = vrcp.pop %v290
  %v293 = vmul.f32 %v282, %v291
  %v294 = vmul.f32 %v284, %v292
  %295 = vrot.lane.b32.xlu0 %v126, 56
  %v296 = vpop.permute.xlu0 %295
  %297 = vrot.lane.b32.xlu0 %v128, 56
  %v298 = vpop.permute.xlu0 %297
  %v302 = vsel %vm172, %v293, 0
  %v305 = vsel %vm172, %v294, 0
  %307 = vmatpush.msra.mxu0 0.0
  %308 = vmatpush.msra.mxu0 0.0
  %309 = vmatpush.msra.mxu0 0.0
  %310 = vmatpush.msra.mxu0 0.0
  %311 = vmatpush.msra.mxu0 0.0
  %312 = vmatpush.msra.mxu0 0.0
  %313 = vmatpush.msra.mxu0 0.0
  %314 = vmatpush.msra.mxu0 0.0
  %315 = vmatpush.msra.mxu0 0.0
  %316 = vmatpush.msra.mxu0 0.0
  %317 = vmatpush.msra.mxu0 0.0
  %318 = vmatpush.msra.mxu0 0.0
  %319 = vmatpush.msra.mxu0 0.0
  %320 = vmatpush.msra.mxu0 0.0
  %321 = vmatpush.msra.mxu0 %v298
  %322 = vmatpush.msra.mxu0 %v296
  %323 = vmatmul.f32.gmra.mxu0 %v302
  %v324 = vpop.f32.mrf.mxu0
  %v325 = vadd.f32 0.0, %v324
  %326 = vmatmul.f32.gmra.mxu0 %v305
  %v327 = vpop.f32.mrf.mxu0
  %v328 = vadd.f32 0.0, %v327
  %329 = vdwg.mxu0
  %330 = vrot.lane.b32.xlu0 %v126, 112
  %v331 = vpop.permute.xlu0 %330
  %332 = vrot.lane.b32.xlu0 %v128, 112
  %v333 = vpop.permute.xlu0 %332
  %334 = vrot.lane.b32.xlu0 %v126, 80
  %v335 = vpop.permute.xlu0 %334
  %336 = vrot.lane.b32.xlu0 %v128, 80
  %v337 = vpop.permute.xlu0 %336
  %v338 = vsel %vm136, %v331, 0
  %v340 = vsel %vm136, %v333, 0
  %v342 = vsel %vm136, %v335, 0
  %v344 = vsel %vm136, %v337, 0
  %346 = vmatpush.xpose.msra.mxu0 0.0
  %347 = vmatpush.xpose.msra.mxu0 0.0
  %348 = vmatpush.xpose.msra.mxu0 0.0
  %349 = vmatpush.xpose.msra.mxu0 0.0
  %350 = vmatpush.xpose.msra.mxu0 0.0
  %351 = vmatpush.xpose.msra.mxu0 0.0
  %352 = vmatpush.xpose.msra.mxu0 0.0
  %353 = vmatpush.xpose.msra.mxu0 0.0
  %354 = vmatpush.xpose.msra.mxu0 0.0
  %355 = vmatpush.xpose.msra.mxu0 0.0
  %356 = vmatpush.xpose.msra.mxu0 0.0
  %357 = vmatpush.xpose.msra.mxu0 0.0
  %358 = vmatpush.xpose.msra.mxu0 0.0
  %359 = vmatpush.xpose.msra.mxu0 0.0
  %360 = vmatpush.xpose.msra.mxu0 %v344
  %361 = vmatpush.xpose.msra.mxu0 %v342
  %362 = vmatmul.f32.gmra.mxu0 %v338
  %v363 = vpop.f32.mrf.mxu0
  %v364 = vadd.f32 0.0, %v363
  %365 = vmatmul.f32.gmra.mxu0 %v340
  %v366 = vpop.f32.mrf.mxu0
  %v367 = vadd.f32 0.0, %v366
  %368 = vdwg.mxu0
  %v369 = vmul.f32 %v364, 0.35355338
  %v370 = vmul.f32 %v367, 0.35355338
  %v371 = vadd.f32 %v369, %v92
  %v372 = vadd.f32 %v370, %v93
  %v373 = vsel %vm172, %v371, -inf
  %374 = vmax.xlane.f32.xlu0 %v373
  %v375 = vpop.xlane.xlu0 %374
  %v376 = vsel %vm172, %v372, -inf
  %377 = vmax.xlane.f32.xlu0 %v376
  %v378 = vpop.xlane.xlu0 %377
  %v379 = vsub.f32 %v371, %v375
  %v380 = vsub.f32 %v372, %v378
  %v381 = vmul.f32 %v379, 1.442695
  %v382 = vpow.pop %v381
  %v383 = vmul.f32 %v380, 1.442695
  %v384 = vpow.pop %v383
  %v385 = vsel %vm172, %v382, 0.0
  %386 = vadd.xlane.f32.xlu0 %v385
  %v387 = vpop.xlane.xlu0 %386
  %v388 = vsel %vm172, %v384, 0.0
  %389 = vadd.xlane.f32.xlu0 %v388
  %v390 = vpop.xlane.xlu0 %389
  %v391 = vrcp.pop %v387
  %v392 = vrcp.pop %v390
  %v393 = vmul.f32 %v382, %v391
  %v394 = vmul.f32 %v384, %v392
  %395 = vrot.lane.b32.xlu0 %v126, 48
  %v396 = vpop.permute.xlu0 %395
  %397 = vrot.lane.b32.xlu0 %v128, 48
  %v398 = vpop.permute.xlu0 %397
  %v402 = vsel %vm172, %v393, 0
  %v405 = vsel %vm172, %v394, 0
  %407 = vmatpush.msra.mxu0 0.0
  %408 = vmatpush.msra.mxu0 0.0
  %409 = vmatpush.msra.mxu0 0.0
  %410 = vmatpush.msra.mxu0 0.0
  %411 = vmatpush.msra.mxu0 0.0
  %412 = vmatpush.msra.mxu0 0.0
  %413 = vmatpush.msra.mxu0 0.0
  %414 = vmatpush.msra.mxu0 0.0
  %415 = vmatpush.msra.mxu0 0.0
  %416 = vmatpush.msra.mxu0 0.0
  %417 = vmatpush.msra.mxu0 0.0
  %418 = vmatpush.msra.mxu0 0.0
  %419 = vmatpush.msra.mxu0 0.0
  %420 = vmatpush.msra.mxu0 0.0
  %421 = vmatpush.msra.mxu0 %v398
  %422 = vmatpush.msra.mxu0 %v396
  %423 = vmatmul.f32.gmra.mxu0 %v402
  %v424 = vpop.f32.mrf.mxu0
  %v425 = vadd.f32 0.0, %v424
  %426 = vmatmul.f32.gmra.mxu0 %v405
  %v427 = vpop.f32.mrf.mxu0
  %v428 = vadd.f32 0.0, %v427
  %429 = vdwg.mxu0
  %430 = vrot.lane.b32.xlu0 %v126, 104
  %v431 = vpop.permute.xlu0 %430
  %432 = vrot.lane.b32.xlu0 %v128, 104
  %v433 = vpop.permute.xlu0 %432
  %434 = vrot.lane.b32.xlu0 %v126, 72
  %v435 = vpop.permute.xlu0 %434
  %436 = vrot.lane.b32.xlu0 %v128, 72
  %v437 = vpop.permute.xlu0 %436
  %v438 = vsel %vm136, %v431, 0
  %v440 = vsel %vm136, %v433, 0
  %v442 = vsel %vm136, %v435, 0
  %v444 = vsel %vm136, %v437, 0
  %446 = vmatpush.xpose.msra.mxu0 0.0
  %447 = vmatpush.xpose.msra.mxu0 0.0
  %448 = vmatpush.xpose.msra.mxu0 0.0
  %449 = vmatpush.xpose.msra.mxu0 0.0
  %450 = vmatpush.xpose.msra.mxu0 0.0
  %451 = vmatpush.xpose.msra.mxu0 0.0
  %452 = vmatpush.xpose.msra.mxu0 0.0
  %453 = vmatpush.xpose.msra.mxu0 0.0
  %454 = vmatpush.xpose.msra.mxu0 0.0
  %455 = vmatpush.xpose.msra.mxu0 0.0
  %456 = vmatpush.xpose.msra.mxu0 0.0
  %457 = vmatpush.xpose.msra.mxu0 0.0
  %458 = vmatpush.xpose.msra.mxu0 0.0
  %459 = vmatpush.xpose.msra.mxu0 0.0
  %460 = vmatpush.xpose.msra.mxu0 %v444
  %461 = vmatpush.xpose.msra.mxu0 %v442
  %462 = vmatmul.f32.gmra.mxu0 %v438
  %v463 = vpop.f32.mrf.mxu0
  %v464 = vadd.f32 0.0, %v463
  %465 = vmatmul.f32.gmra.mxu0 %v440
  %v466 = vpop.f32.mrf.mxu0
  %v467 = vadd.f32 0.0, %v466
  %468 = vdwg.mxu0
  %v469 = vmul.f32 %v464, 0.35355338
  %v470 = vmul.f32 %v467, 0.35355338
  %v471 = vadd.f32 %v469, %v92
  %v472 = vadd.f32 %v470, %v93
  %v473 = vsel %vm172, %v471, -inf
  %474 = vmax.xlane.f32.xlu0 %v473
  %v475 = vpop.xlane.xlu0 %474
  %v476 = vsel %vm172, %v472, -inf
  %477 = vmax.xlane.f32.xlu0 %v476
  %v478 = vpop.xlane.xlu0 %477
  %v479 = vsub.f32 %v471, %v475
  %v480 = vsub.f32 %v472, %v478
  %v481 = vmul.f32 %v479, 1.442695
  %v482 = vpow.pop %v481
  %v483 = vmul.f32 %v480, 1.442695
  %v484 = vpow.pop %v483
  %v485 = vsel %vm172, %v482, 0.0
  %486 = vadd.xlane.f32.xlu0 %v485
  %v487 = vpop.xlane.xlu0 %486
  %v488 = vsel %vm172, %v484, 0.0
  %489 = vadd.xlane.f32.xlu0 %v488
  %v490 = vpop.xlane.xlu0 %489
  %v491 = vrcp.pop %v487
  %v492 = vrcp.pop %v490
  %v493 = vmul.f32 %v482, %v491
  %v494 = vmul.f32 %v484, %v492
  %495 = vrot.lane.b32.xlu0 %v126, 40
  %v496 = vpop.permute.xlu0 %495
  %497 = vrot.lane.b32.xlu0 %v128, 40
  %v498 = vpop.permute.xlu0 %497
  %v502 = vsel %vm172, %v493, 0
  %v505 = vsel %vm172, %v494, 0
  %507 = vmatpush.msra.mxu0 0.0
  %508 = vmatpush.msra.mxu0 0.0
  %509 = vmatpush.msra.mxu0 0.0
  %510 = vmatpush.msra.mxu0 0.0
  %511 = vmatpush.msra.mxu0 0.0
  %512 = vmatpush.msra.mxu0 0.0
  %513 = vmatpush.msra.mxu0 0.0
  %514 = vmatpush.msra.mxu0 0.0
  %515 = vmatpush.msra.mxu0 0.0
  %516 = vmatpush.msra.mxu0 0.0
  %517 = vmatpush.msra.mxu0 0.0
  %518 = vmatpush.msra.mxu0 0.0
  %519 = vmatpush.msra.mxu0 0.0
  %520 = vmatpush.msra.mxu0 0.0
  %521 = vmatpush.msra.mxu0 %v498
  %522 = vmatpush.msra.mxu0 %v496
  %523 = vmatmul.f32.gmra.mxu0 %v502
  %v524 = vpop.f32.mrf.mxu0
  %v525 = vadd.f32 0.0, %v524
  %526 = vmatmul.f32.gmra.mxu0 %v505
  %v527 = vpop.f32.mrf.mxu0
  %v528 = vadd.f32 0.0, %v527
  %529 = vdwg.mxu0
  %532 = vrot.lane.b32.xlu0 %v325, 8
  %v533 = vpop.permute.xlu0 %532
  %534 = vrot.lane.b32.xlu0 %v328, 8
  %v535 = vpop.permute.xlu0 %534
  %540 = vrot.lane.b32.xlu0 %v425, 16
  %v541 = vpop.permute.xlu0 %540
  %542 = vrot.lane.b32.xlu0 %v428, 16
  %v543 = vpop.permute.xlu0 %542
  %548 = vrot.lane.b32.xlu0 %v525, 24
  %v549 = vpop.permute.xlu0 %548
  %550 = vrot.lane.b32.xlu0 %v528, 24
  %v551 = vpop.permute.xlu0 %550
  %v554 = vsel %vm136, %v225, %v533
  %v555 = vsel %vm136, %v228, %v535
  %v556 = vsel %vm172, %v554, %v541
  %v557 = vsel %vm172, %v555, %v543
  %vm558 = vcmask 195584
  %v559 = vsel %vm558, %v556, %v549
  %v560 = vsel %vm558, %v557, %v551
  %v561 = vpack.c.bf16 %v560, %v559
  %v562 = vld [vmem:[%s4] sm:$0xf]
  %v563 = vld [vmem:[%s4 + $0x4] sm:$0xf]
  %v564 = vld [vmem:[%s4 + $0x8] sm:$0xf]
  %v565 = vld [vmem:[%s4 + $0xc] sm:$0xf]
  %v566 = vld [vmem:[%s7 + $0x29] sm:$0x1]
  %v567 = vperm.slane %v566, 0
  %v572 = vunpack.c.l.b16 %v562
  %v573 = vunpack.c.l.b16 %v563
  %v574 = vunpack.c.l.b16 %v564
  %v575 = vunpack.c.l.b16 %v565
  %v576 = vpack.c.b16 %v573, %v572
  %v577 = vpack.c.b16 %v575, %v574
  %v581 = vsel %vm34, %v561, 0
  %583 = vmatpush.bf16.msra.mxu0 0
  %584 = vmatpush.bf16.msra.mxu0 0
  %585 = vmatpush.bf16.msra.mxu0 0
  %586 = vmatpush.bf16.msra.mxu0 0
  %587 = vmatpush.bf16.msra.mxu0 0
  %588 = vmatpush.bf16.msra.mxu0 0
  %589 = vmatpush.bf16.msra.mxu0 %v577
  %590 = vmatpush.bf16.msra.mxu0 %v576
  %591 = vmatmul.bf16.gmra.mxu0 %v581
  %v592 = vpop.f32.mrf.mxu0
  %v593 = vadd.f32 %v567, %v592
  %v594 = vpop.f32.mrf.mxu0
  %v595 = vadd.f32 %v567, %v594
  %596 = vdwg.mxu0
  %v597 = vadd.f32 %v90, %v593
  %v598 = vadd.f32 %v91, %v595
  %v599 = vld [vmem:[%s7 + $0x2a] sm:$0x1]
  %v600 = vld [vmem:[%s7 + $0x2b] sm:$0x1]
  %v601 = vsel %vm34, %v597, 0.0
  %602 = vadd.xlane.f32.xlu0 %v601
  %v603 = vpop.xlane.xlu0 %602
  %v604 = vsel %vm34, %v598, 0.0
  %605 = vadd.xlane.f32.xlu0 %v604
  %v606 = vpop.xlane.xlu0 %605
  %v607 = vmul.f32 %v603, %v47
  %v608 = vmul.f32 %v606, %v47
  %v609 = vsub.f32 %v597, %v607
  %v610 = vsub.f32 %v598, %v608
  %v611 = vmul.f32 %v609, %v609
  %v612 = vmul.f32 %v610, %v610
  %v613 = vsel %vm34, %v611, 0.0
  %614 = vadd.xlane.f32.xlu0 %v613
  %v615 = vpop.xlane.xlu0 %614
  %v616 = vsel %vm34, %v612, 0.0
  %617 = vadd.xlane.f32.xlu0 %v616
  %v618 = vpop.xlane.xlu0 %617
  %v619 = vmul.f32 %v615, %v47
  %v620 = vmul.f32 %v618, %v47
  %v621 = vadd.f32 %v619, 1e-12
  %v622 = vadd.f32 %v620, 1e-12
  %v623 = vrsqrt.pop %v621
  %v624 = vmul.f32 %v623, %v621
  %v625 = vmul.f32 %v624, %v623
  %v626 = vmul.f32 0.5, %v625
  %v627 = vsub.f32 1.5, %v626
  %v628 = vmul.f32 %v623, %v627
  %vm629 = vweird.f32 %v621
  %vm630 = vweird.f32 %v623
  %vm631 = vmor %vm629, %vm630
  %v632 = vsel %vm631, %v623, %v628
  %v633 = vrsqrt.pop %v622
  %v634 = vmul.f32 %v633, %v622
  %v635 = vmul.f32 %v634, %v633
  %v636 = vmul.f32 0.5, %v635
  %v637 = vsub.f32 1.5, %v636
  %v638 = vmul.f32 %v633, %v637
  %vm639 = vweird.f32 %v622
  %vm640 = vweird.f32 %v633
  %vm641 = vmor %vm639, %vm640
  %v642 = vsel %vm641, %v633, %v638
  %v643 = vmul.f32 %v609, %v632
  %v644 = vmul.f32 %v610, %v642
  %v645 = vperm.slane %v599, 0
  %v646 = vmul.f32 %v643, %v645
  %v647 = vmul.f32 %v644, %v645
  %v648 = vperm.slane %v600, 0
  %v649 = vadd.f32 %v646, %v648
  %v650 = vadd.f32 %v647, %v648
  %v651 = vpack.c.bf16 %v650, %v649
  %v652 = vld [vmem:[%s5] sm:$0xf]
  %v653 = vld [vmem:[%s5 + $0x4] sm:$0xf]
  %v654 = vld [vmem:[%s5 + $0x8] sm:$0xf]
  %v655 = vld [vmem:[%s5 + $0xc] sm:$0xf]
  %v656 = vld [vmem:[%s7 + $0x2c] sm:$0x1]
  %v657 = vperm.slane %v656, 0
  %v662 = vunpack.c.l.b16 %v652
  %v663 = vunpack.c.l.b16 %v653
  %v664 = vunpack.c.l.b16 %v654
  %v665 = vunpack.c.l.b16 %v655
  %v666 = vpack.c.b16 %v663, %v662
  %v667 = vpack.c.b16 %v665, %v664
  %v671 = vsel %vm34, %v651, 0
  %673 = vmatpush.bf16.msra.mxu0 0
  %674 = vmatpush.bf16.msra.mxu0 0
  %675 = vmatpush.bf16.msra.mxu0 0
  %676 = vmatpush.bf16.msra.mxu0 0
  %677 = vmatpush.bf16.msra.mxu0 0
  %678 = vmatpush.bf16.msra.mxu0 0
  %679 = vmatpush.bf16.msra.mxu0 %v667
  %680 = vmatpush.bf16.msra.mxu0 %v666
  %681 = vmatmul.bf16.gmra.mxu0 %v671
  %v682 = vpop.f32.mrf.mxu0
  %v683 = vadd.f32 %v657, %v682
  %v684 = vpop.f32.mrf.mxu0
  %v685 = vadd.f32 %v657, %v684
  %686 = vdwg.mxu0
  %v687 = vmul.f32 %v683, 0.5
  %v688 = vmul.f32 %v685, 0.5
  %v689 = vmul.f32 %v683, 0.70710677
  %v690 = vmul.f32 %v685, 0.70710677
  %vm691 = vcmp.ge.f32.partialorder %v689, 0.0
  %vm692 = vcmp.ge.f32.partialorder %v690, 0.0
  %v693 = vsel %vm691, 1.0, -1.0
  %v694 = vsel %vm692, 1.0, -1.0
  %v695 = vand.u32 2147483647, %v689
  %v696 = vand.u32 2147483647, %v690
  %v697 = vmul.f32 %v695, 0.3275911
  %v698 = vmul.f32 %v696, 0.3275911
  %v699 = vadd.f32 %v697, 1.0
  %v700 = vadd.f32 %v698, 1.0
  %v701 = vrcp.pop %v699
  %v702 = vmul.f32 %v699, %v701
  %v703 = vsub.f32 1.0, %v702
  %v704 = vmul.f32 %v701, %v703
  %v705 = vadd.f32 %v701, %v704
  %vm706 = vweird.f32 %v699
  %vm707 = vweird.f32 %v701
  %vm708 = vmor %vm706, %vm707
  %v709 = vsel %vm708, %v701, %v705
  %v710 = vand.u32 2147483647, %v699
  %vm711 = vcmp.eq.f32.partialorder %v710, 8.507059e+37
  %v712 = vand.u32 %v699, 2147483648
  %v713 = vor.u32 1.1754944e-38, %v712
  %v714 = vsel %vm711, %v713, %v709
  %v715 = vrcp.pop %v700
  %v716 = vmul.f32 %v700, %v715
  %v717 = vsub.f32 1.0, %v716
  %v718 = vmul.f32 %v715, %v717
  %v719 = vadd.f32 %v715, %v718
  %vm720 = vweird.f32 %v700
  %vm721 = vweird.f32 %v715
  %vm722 = vmor %vm720, %vm721
  %v723 = vsel %vm722, %v715, %v719
  %v724 = vand.u32 2147483647, %v700
  %vm725 = vcmp.eq.f32.partialorder %v724, 8.507059e+37
  %v726 = vand.u32 %v700, 2147483648
  %v727 = vor.u32 1.1754944e-38, %v726
  %v728 = vsel %vm725, %v727, %v723
  %v729 = vmul.f32 %v714, 1.0614054
  %v730 = vmul.f32 %v728, 1.0614054
  %v731 = vadd.f32 %v729, -1.4531521
  %v732 = vadd.f32 %v730, -1.4531521
  %v733 = vmul.f32 %v731, %v714
  %v734 = vmul.f32 %v732, %v728
  %v735 = vadd.f32 %v733, 1.4214138
  %v736 = vadd.f32 %v734, 1.4214138
  %v737 = vmul.f32 %v735, %v714
  %v738 = vmul.f32 %v736, %v728
  %v739 = vadd.f32 %v737, -0.28449672
  %v740 = vadd.f32 %v738, -0.28449672
  %v741 = vmul.f32 %v739, %v714
  %v742 = vmul.f32 %v740, %v728
  %v743 = vadd.f32 %v741, 0.2548296
  %v744 = vadd.f32 %v742, 0.2548296
  %v745 = vmul.f32 %v743, %v714
  %v746 = vmul.f32 %v744, %v728
  %v747 = vmul.f32 %v695, %v695
  %v748 = vmul.f32 %v696, %v696
  %v749 = vsub.f32 0.0, %v747
  %v750 = vsub.f32 0.0, %v748
  %v751 = vmul.f32 %v749, 1.442695
  %v752 = vpow.pop %v751
  %v753 = vmul.f32 %v750, 1.442695
  %v754 = vpow.pop %v753
  %v755 = vmul.f32 %v745, %v752
  %v756 = vmul.f32 %v746, %v754
  %v757 = vsub.f32 1.0, %v755
  %v758 = vsub.f32 1.0, %v756
  %v759 = vmul.f32 %v693, %v757
  %v760 = vmul.f32 %v694, %v758
  %v761 = vadd.f32 %v759, 1.0
  %v762 = vadd.f32 %v760, 1.0
  %v763 = vmul.f32 %v687, %v761
  %v764 = vmul.f32 %v688, %v762
  %v765 = vpack.c.bf16 %v764, %v763
  %v766 = vld [vmem:[%s6] sm:$0xf]
  %v767 = vld [vmem:[%s6 + $0x4] sm:$0xf]
  %v768 = vld [vmem:[%s6 + $0x8] sm:$0xf]
  %v769 = vld [vmem:[%s6 + $0xc] sm:$0xf]
  %v770 = vld [vmem:[%s6 + $0x10] sm:$0xf]
  %v771 = vld [vmem:[%s6 + $0x14] sm:$0xf]
  %v772 = vld [vmem:[%s6 + $0x18] sm:$0xf]
  %v773 = vld [vmem:[%s6 + $0x1c] sm:$0xf]
  %v774 = vld [vmem:[%s7 + $0x2d] sm:$0x1]
  %v775 = vperm.slane %v774, 0
  %v784 = vunpack.c.l.b16 %v766
  %v785 = vunpack.c.l.b16 %v767
  %v786 = vunpack.c.l.b16 %v768
  %v787 = vunpack.c.l.b16 %v769
  %v788 = vunpack.c.l.b16 %v770
  %v789 = vunpack.c.l.b16 %v771
  %v790 = vunpack.c.l.b16 %v772
  %v791 = vunpack.c.l.b16 %v773
  %v792 = vpack.c.b16 %v785, %v784
  %v793 = vpack.c.b16 %v787, %v786
  %v794 = vpack.c.b16 %v789, %v788
  %v795 = vpack.c.b16 %v791, %v790
  %vm800 = vcmask 523264
  %v802 = vsel %vm800, %v765, 0
  %804 = vmatpush.bf16.msra.mxu0 0
  %805 = vmatpush.bf16.msra.mxu0 0
  %806 = vmatpush.bf16.msra.mxu0 0
  %807 = vmatpush.bf16.msra.mxu0 0
  %808 = vmatpush.bf16.msra.mxu0 %v795
  %809 = vmatpush.bf16.msra.mxu0 %v794
  %810 = vmatpush.bf16.msra.mxu0 %v793
  %811 = vmatpush.bf16.msra.mxu0 %v792
  %812 = vmatmul.bf16.gmra.mxu0 %v802
  %v813 = vpop.f32.mrf.mxu0
  %v814 = vadd.f32 %v775, %v813
  %v815 = vpop.f32.mrf.mxu0
  %v816 = vadd.f32 %v775, %v815
  %817 = vdwg.mxu0
  %v818 = vadd.f32 %v649, %v814
  %v819 = vadd.f32 %v650, %v816
  %v820 = vld [vmem:[%s7 + $0x2e] sm:$0x1]
  %v821 = vld [vmem:[%s7 + $0x2f] sm:$0x1]
  %v822 = vsel %vm34, %v818, 0.0
  %823 = vadd.xlane.f32.xlu0 %v822
  %v824 = vpop.xlane.xlu0 %823
  %v825 = vsel %vm34, %v819, 0.0
  %826 = vadd.xlane.f32.xlu0 %v825
  %v827 = vpop.xlane.xlu0 %826
  %v828 = vmul.f32 %v824, %v47
  %v829 = vmul.f32 %v827, %v47
  %v830 = vsub.f32 %v818, %v828
  %v831 = vsub.f32 %v819, %v829
  %v832 = vmul.f32 %v830, %v830
  %v833 = vmul.f32 %v831, %v831
  %v834 = vsel %vm34, %v832, 0.0
  %835 = vadd.xlane.f32.xlu0 %v834
  %v836 = vpop.xlane.xlu0 %835
  %v837 = vsel %vm34, %v833, 0.0
  %838 = vadd.xlane.f32.xlu0 %v837
  %v839 = vpop.xlane.xlu0 %838
  %v840 = vmul.f32 %v836, %v47
  %v841 = vmul.f32 %v839, %v47
  %v842 = vadd.f32 %v840, 1e-12
  %v843 = vadd.f32 %v841, 1e-12
  %v844 = vrsqrt.pop %v842
  %v845 = vmul.f32 %v844, %v842
  %v846 = vmul.f32 %v845, %v844
  %v847 = vmul.f32 0.5, %v846
  %v848 = vsub.f32 1.5, %v847
  %v849 = vmul.f32 %v844, %v848
  %vm850 = vweird.f32 %v842
  %vm851 = vweird.f32 %v844
  %vm852 = vmor %vm850, %vm851
  %v853 = vsel %vm852, %v844, %v849
  %v854 = vrsqrt.pop %v843
  %v855 = vmul.f32 %v854, %v843
  %v856 = vmul.f32 %v855, %v854
  %v857 = vmul.f32 0.5, %v856
  %v858 = vsub.f32 1.5, %v857
  %v859 = vmul.f32 %v854, %v858
  %vm860 = vweird.f32 %v843
  %vm861 = vweird.f32 %v854
  %vm862 = vmor %vm860, %vm861
  %v863 = vsel %vm862, %v854, %v859
  %v864 = vmul.f32 %v830, %v853
  %v865 = vmul.f32 %v831, %v863
  %v866 = vperm.slane %v820, 0
  %v867 = vmul.f32 %v864, %v866
  %v868 = vmul.f32 %v865, %v866
  %v869 = vperm.slane %v821, 0
  %v870 = vadd.f32 %v867, %v869
  %v871 = vadd.f32 %v868, %v869
  %v872 = vpack.c.bf16 %v871, %v870
  %s873 = scalar_lea.vmem %s3, 16
  %v874 = vld [vmem:[%s873] sm:$0xf]
  %v875 = vld [vmem:[%s873 + $0x4] sm:$0xf]
  %v876 = vld [vmem:[%s873 + $0x8] sm:$0xf]
  %v877 = vld [vmem:[%s873 + $0xc] sm:$0xf]
  %v878 = vld [vmem:[%s7 + $0x30] sm:$0x1]
  %v879 = vperm.slane %v878, 0
  %v884 = vunpack.c.l.b16 %v874
  %v885 = vunpack.c.l.b16 %v875
  %v886 = vunpack.c.l.b16 %v876
  %v887 = vunpack.c.l.b16 %v877
  %v888 = vpack.c.b16 %v885, %v884
  %v889 = vpack.c.b16 %v887, %v886
  %v893 = vsel %vm34, %v872, 0
  %895 = vmatpush.bf16.msra.mxu0 0
  %896 = vmatpush.bf16.msra.mxu0 0
  %897 = vmatpush.bf16.msra.mxu0 0
  %898 = vmatpush.bf16.msra.mxu0 0
  %899 = vmatpush.bf16.msra.mxu0 0
  %900 = vmatpush.bf16.msra.mxu0 0
  %901 = vmatpush.bf16.msra.mxu0 %v889
  %902 = vmatpush.bf16.msra.mxu0 %v888
  %903 = vmatmul.bf16.gmra.mxu0 %v893
  %v904 = vpop.f32.mrf.mxu0
  %v905 = vadd.f32 %v879, %v904
  %v906 = vpop.f32.mrf.mxu0
  %v907 = vadd.f32 %v879, %v906
  %908 = vdwg.mxu0
  %911 = vrot.lane.b32.xlu0 %v905, 96
  %v912 = vpop.permute.xlu0 %911
  %913 = vrot.lane.b32.xlu0 %v907, 96
  %v914 = vpop.permute.xlu0 %913
  %v915 = vsel %vm136, %v905, 0
  %v917 = vsel %vm136, %v907, 0
  %v919 = vsel %vm136, %v912, 0
  %v921 = vsel %vm136, %v914, 0
  %923 = vmatpush.xpose.msra.mxu0 0.0
  %924 = vmatpush.xpose.msra.mxu0 0.0
  %925 = vmatpush.xpose.msra.mxu0 0.0
  %926 = vmatpush.xpose.msra.mxu0 0.0
  %927 = vmatpush.xpose.msra.mxu0 0.0
  %928 = vmatpush.xpose.msra.mxu0 0.0
  %929 = vmatpush.xpose.msra.mxu0 0.0
  %930 = vmatpush.xpose.msra.mxu0 0.0
  %931 = vmatpush.xpose.msra.mxu0 0.0
  %932 = vmatpush.xpose.msra.mxu0 0.0
  %933 = vmatpush.xpose.msra.mxu0 0.0
  %934 = vmatpush.xpose.msra.mxu0 0.0
  %935 = vmatpush.xpose.msra.mxu0 0.0
  %936 = vmatpush.xpose.msra.mxu0 0.0
  %937 = vmatpush.xpose.msra.mxu0 %v921
  %938 = vmatpush.xpose.msra.mxu0 %v919
  %939 = vmatmul.f32.gmra.mxu0 %v915
  %v940 = vpop.f32.mrf.mxu0
  %v941 = vadd.f32 0.0, %v940
  %942 = vmatmul.f32.gmra.mxu0 %v917
  %v943 = vpop.f32.mrf.mxu0
  %v944 = vadd.f32 0.0, %v943
  %945 = vdwg.mxu0
  %v946 = vmul.f32 %v941, 0.35355338
  %v947 = vmul.f32 %v944, 0.35355338
  %v948 = vadd.f32 %v946, %v92
  %v949 = vadd.f32 %v947, %v93
  %v950 = vsel %vm172, %v948, -inf
  %951 = vmax.xlane.f32.xlu0 %v950
  %v952 = vpop.xlane.xlu0 %951
  %v953 = vsel %vm172, %v949, -inf
  %954 = vmax.xlane.f32.xlu0 %v953
  %v955 = vpop.xlane.xlu0 %954
  %v956 = vsub.f32 %v948, %v952
  %v957 = vsub.f32 %v949, %v955
  %v958 = vmul.f32 %v956, 1.442695
  %v959 = vpow.pop %v958
  %v960 = vmul.f32 %v957, 1.442695
  %v961 = vpow.pop %v960
  %v962 = vsel %vm172, %v959, 0.0
  %963 = vadd.xlane.f32.xlu0 %v962
  %v964 = vpop.xlane.xlu0 %963
  %v965 = vsel %vm172, %v961, 0.0
  %966 = vadd.xlane.f32.xlu0 %v965
  %v967 = vpop.xlane.xlu0 %966
  %v968 = vrcp.pop %v964
  %v969 = vrcp.pop %v967
  %v970 = vmul.f32 %v959, %v968
  %v971 = vmul.f32 %v961, %v969
  %972 = vrot.lane.b32.xlu0 %v905, 64
  %v973 = vpop.permute.xlu0 %972
  %974 = vrot.lane.b32.xlu0 %v907, 64
  %v975 = vpop.permute.xlu0 %974
  %v979 = vsel %vm172, %v970, 0
  %v982 = vsel %vm172, %v971, 0
  %984 = vmatpush.msra.mxu0 0.0
  %985 = vmatpush.msra.mxu0 0.0
  %986 = vmatpush.msra.mxu0 0.0
  %987 = vmatpush.msra.mxu0 0.0
  %988 = vmatpush.msra.mxu0 0.0
  %989 = vmatpush.msra.mxu0 0.0
  %990 = vmatpush.msra.mxu0 0.0
  %991 = vmatpush.msra.mxu0 0.0
  %992 = vmatpush.msra.mxu0 0.0
  %993 = vmatpush.msra.mxu0 0.0
  %994 = vmatpush.msra.mxu0 0.0
  %995 = vmatpush.msra.mxu0 0.0
  %996 = vmatpush.msra.mxu0 0.0
  %997 = vmatpush.msra.mxu0 0.0
  %998 = vmatpush.msra.mxu0 %v975
  %999 = vmatpush.msra.mxu0 %v973
  %1000 = vmatmul.f32.gmra.mxu0 %v979
  %v1001 = vpop.f32.mrf.mxu0
  %v1002 = vadd.f32 0.0, %v1001
  %1003 = vmatmul.f32.gmra.mxu0 %v982
  %v1004 = vpop.f32.mrf.mxu0
  %v1005 = vadd.f32 0.0, %v1004
  %1006 = vdwg.mxu0
  %1007 = vrot.lane.b32.xlu0 %v905, 120
  %v1008 = vpop.permute.xlu0 %1007
  %1009 = vrot.lane.b32.xlu0 %v907, 120
  %v1010 = vpop.permute.xlu0 %1009
  %1011 = vrot.lane.b32.xlu0 %v905, 88
  %v1012 = vpop.permute.xlu0 %1011
  %1013 = vrot.lane.b32.xlu0 %v907, 88
  %v1014 = vpop.permute.xlu0 %1013
  %v1015 = vsel %vm136, %v1008, 0
  %v1017 = vsel %vm136, %v1010, 0
  %v1019 = vsel %vm136, %v1012, 0
  %v1021 = vsel %vm136, %v1014, 0
  %1023 = vmatpush.xpose.msra.mxu0 0.0
  %1024 = vmatpush.xpose.msra.mxu0 0.0
  %1025 = vmatpush.xpose.msra.mxu0 0.0
  %1026 = vmatpush.xpose.msra.mxu0 0.0
  %1027 = vmatpush.xpose.msra.mxu0 0.0
  %1028 = vmatpush.xpose.msra.mxu0 0.0
  %1029 = vmatpush.xpose.msra.mxu0 0.0
  %1030 = vmatpush.xpose.msra.mxu0 0.0
  %1031 = vmatpush.xpose.msra.mxu0 0.0
  %1032 = vmatpush.xpose.msra.mxu0 0.0
  %1033 = vmatpush.xpose.msra.mxu0 0.0
  %1034 = vmatpush.xpose.msra.mxu0 0.0
  %1035 = vmatpush.xpose.msra.mxu0 0.0
  %1036 = vmatpush.xpose.msra.mxu0 0.0
  %1037 = vmatpush.xpose.msra.mxu0 %v1021
  %1038 = vmatpush.xpose.msra.mxu0 %v1019
  %1039 = vmatmul.f32.gmra.mxu0 %v1015
  %v1040 = vpop.f32.mrf.mxu0
  %v1041 = vadd.f32 0.0, %v1040
  %1042 = vmatmul.f32.gmra.mxu0 %v1017
  %v1043 = vpop.f32.mrf.mxu0
  %v1044 = vadd.f32 0.0, %v1043
  %1045 = vdwg.mxu0
  %v1046 = vmul.f32 %v1041, 0.35355338
  %v1047 = vmul.f32 %v1044, 0.35355338
  %v1048 = vadd.f32 %v1046, %v92
  %v1049 = vadd.f32 %v1047, %v93
  %v1050 = vsel %vm172, %v1048, -inf
  %1051 = vmax.xlane.f32.xlu0 %v1050
  %v1052 = vpop.xlane.xlu0 %1051
  %v1053 = vsel %vm172, %v1049, -inf
  %1054 = vmax.xlane.f32.xlu0 %v1053
  %v1055 = vpop.xlane.xlu0 %1054
  %v1056 = vsub.f32 %v1048, %v1052
  %v1057 = vsub.f32 %v1049, %v1055
  %v1058 = vmul.f32 %v1056, 1.442695
  %v1059 = vpow.pop %v1058
  %v1060 = vmul.f32 %v1057, 1.442695
  %v1061 = vpow.pop %v1060
  %v1062 = vsel %vm172, %v1059, 0.0
  %1063 = vadd.xlane.f32.xlu0 %v1062
  %v1064 = vpop.xlane.xlu0 %1063
  %v1065 = vsel %vm172, %v1061, 0.0
  %1066 = vadd.xlane.f32.xlu0 %v1065
  %v1067 = vpop.xlane.xlu0 %1066
  %v1068 = vrcp.pop %v1064
  %v1069 = vrcp.pop %v1067
  %v1070 = vmul.f32 %v1059, %v1068
  %v1071 = vmul.f32 %v1061, %v1069
  %1072 = vrot.lane.b32.xlu0 %v905, 56
  %v1073 = vpop.permute.xlu0 %1072
  %1074 = vrot.lane.b32.xlu0 %v907, 56
  %v1075 = vpop.permute.xlu0 %1074
  %v1079 = vsel %vm172, %v1070, 0
  %v1082 = vsel %vm172, %v1071, 0
  %1084 = vmatpush.msra.mxu0 0.0
  %1085 = vmatpush.msra.mxu0 0.0
  %1086 = vmatpush.msra.mxu0 0.0
  %1087 = vmatpush.msra.mxu0 0.0
  %1088 = vmatpush.msra.mxu0 0.0
  %1089 = vmatpush.msra.mxu0 0.0
  %1090 = vmatpush.msra.mxu0 0.0
  %1091 = vmatpush.msra.mxu0 0.0
  %1092 = vmatpush.msra.mxu0 0.0
  %1093 = vmatpush.msra.mxu0 0.0
  %1094 = vmatpush.msra.mxu0 0.0
  %1095 = vmatpush.msra.mxu0 0.0
  %1096 = vmatpush.msra.mxu0 0.0
  %1097 = vmatpush.msra.mxu0 0.0
  %1098 = vmatpush.msra.mxu0 %v1075
  %1099 = vmatpush.msra.mxu0 %v1073
  %1100 = vmatmul.f32.gmra.mxu0 %v1079
  %v1101 = vpop.f32.mrf.mxu0
  %v1102 = vadd.f32 0.0, %v1101
  %1103 = vmatmul.f32.gmra.mxu0 %v1082
  %v1104 = vpop.f32.mrf.mxu0
  %v1105 = vadd.f32 0.0, %v1104
  %1106 = vdwg.mxu0
  %1107 = vrot.lane.b32.xlu0 %v905, 112
  %v1108 = vpop.permute.xlu0 %1107
  %1109 = vrot.lane.b32.xlu0 %v907, 112
  %v1110 = vpop.permute.xlu0 %1109
  %1111 = vrot.lane.b32.xlu0 %v905, 80
  %v1112 = vpop.permute.xlu0 %1111
  %1113 = vrot.lane.b32.xlu0 %v907, 80
  %v1114 = vpop.permute.xlu0 %1113
  %v1115 = vsel %vm136, %v1108, 0
  %v1117 = vsel %vm136, %v1110, 0
  %v1119 = vsel %vm136, %v1112, 0
  %v1121 = vsel %vm136, %v1114, 0
  %1123 = vmatpush.xpose.msra.mxu0 0.0
  %1124 = vmatpush.xpose.msra.mxu0 0.0
  %1125 = vmatpush.xpose.msra.mxu0 0.0
  %1126 = vmatpush.xpose.msra.mxu0 0.0
  %1127 = vmatpush.xpose.msra.mxu0 0.0
  %1128 = vmatpush.xpose.msra.mxu0 0.0
  %1129 = vmatpush.xpose.msra.mxu0 0.0
  %1130 = vmatpush.xpose.msra.mxu0 0.0
  %1131 = vmatpush.xpose.msra.mxu0 0.0
  %1132 = vmatpush.xpose.msra.mxu0 0.0
  %1133 = vmatpush.xpose.msra.mxu0 0.0
  %1134 = vmatpush.xpose.msra.mxu0 0.0
  %1135 = vmatpush.xpose.msra.mxu0 0.0
  %1136 = vmatpush.xpose.msra.mxu0 0.0
  %1137 = vmatpush.xpose.msra.mxu0 %v1121
  %1138 = vmatpush.xpose.msra.mxu0 %v1119
  %1139 = vmatmul.f32.gmra.mxu0 %v1115
  %v1140 = vpop.f32.mrf.mxu0
  %v1141 = vadd.f32 0.0, %v1140
  %1142 = vmatmul.f32.gmra.mxu0 %v1117
  %v1143 = vpop.f32.mrf.mxu0
  %v1144 = vadd.f32 0.0, %v1143
  %1145 = vdwg.mxu0
  %v1146 = vmul.f32 %v1141, 0.35355338
  %v1147 = vmul.f32 %v1144, 0.35355338
  %v1148 = vadd.f32 %v1146, %v92
  %v1149 = vadd.f32 %v1147, %v93
  %v1150 = vsel %vm172, %v1148, -inf
  %1151 = vmax.xlane.f32.xlu0 %v1150
  %v1152 = vpop.xlane.xlu0 %1151
  %v1153 = vsel %vm172, %v1149, -inf
  %1154 = vmax.xlane.f32.xlu0 %v1153
  %v1155 = vpop.xlane.xlu0 %1154
  %v1156 = vsub.f32 %v1148, %v1152
  %v1157 = vsub.f32 %v1149, %v1155
  %v1158 = vmul.f32 %v1156, 1.442695
  %v1159 = vpow.pop %v1158
  %v1160 = vmul.f32 %v1157, 1.442695
  %v1161 = vpow.pop %v1160
  %v1162 = vsel %vm172, %v1159, 0.0
  %1163 = vadd.xlane.f32.xlu0 %v1162
  %v1164 = vpop.xlane.xlu0 %1163
  %v1165 = vsel %vm172, %v1161, 0.0
  %1166 = vadd.xlane.f32.xlu0 %v1165
  %v1167 = vpop.xlane.xlu0 %1166
  %v1168 = vrcp.pop %v1164
  %v1169 = vrcp.pop %v1167
  %v1170 = vmul.f32 %v1159, %v1168
  %v1171 = vmul.f32 %v1161, %v1169
  %1172 = vrot.lane.b32.xlu0 %v905, 48
  %v1173 = vpop.permute.xlu0 %1172
  %1174 = vrot.lane.b32.xlu0 %v907, 48
  %v1175 = vpop.permute.xlu0 %1174
  %v1179 = vsel %vm172, %v1170, 0
  %v1182 = vsel %vm172, %v1171, 0
  %1184 = vmatpush.msra.mxu0 0.0
  %1185 = vmatpush.msra.mxu0 0.0
  %1186 = vmatpush.msra.mxu0 0.0
  %1187 = vmatpush.msra.mxu0 0.0
  %1188 = vmatpush.msra.mxu0 0.0
  %1189 = vmatpush.msra.mxu0 0.0
  %1190 = vmatpush.msra.mxu0 0.0
  %1191 = vmatpush.msra.mxu0 0.0
  %1192 = vmatpush.msra.mxu0 0.0
  %1193 = vmatpush.msra.mxu0 0.0
  %1194 = vmatpush.msra.mxu0 0.0
  %1195 = vmatpush.msra.mxu0 0.0
  %1196 = vmatpush.msra.mxu0 0.0
  %1197 = vmatpush.msra.mxu0 0.0
  %1198 = vmatpush.msra.mxu0 %v1175
  %1199 = vmatpush.msra.mxu0 %v1173
  %1200 = vmatmul.f32.gmra.mxu0 %v1179
  %v1201 = vpop.f32.mrf.mxu0
  %v1202 = vadd.f32 0.0, %v1201
  %1203 = vmatmul.f32.gmra.mxu0 %v1182
  %v1204 = vpop.f32.mrf.mxu0
  %v1205 = vadd.f32 0.0, %v1204
  %1206 = vdwg.mxu0
  %1207 = vrot.lane.b32.xlu0 %v905, 104
  %v1208 = vpop.permute.xlu0 %1207
  %1209 = vrot.lane.b32.xlu0 %v907, 104
  %v1210 = vpop.permute.xlu0 %1209
  %1211 = vrot.lane.b32.xlu0 %v905, 72
  %v1212 = vpop.permute.xlu0 %1211
  %1213 = vrot.lane.b32.xlu0 %v907, 72
  %v1214 = vpop.permute.xlu0 %1213
  %v1215 = vsel %vm136, %v1208, 0
  %v1217 = vsel %vm136, %v1210, 0
  %v1219 = vsel %vm136, %v1212, 0
  %v1221 = vsel %vm136, %v1214, 0
  %1223 = vmatpush.xpose.msra.mxu0 0.0
  %1224 = vmatpush.xpose.msra.mxu0 0.0
  %1225 = vmatpush.xpose.msra.mxu0 0.0
  %1226 = vmatpush.xpose.msra.mxu0 0.0
  %1227 = vmatpush.xpose.msra.mxu0 0.0
  %1228 = vmatpush.xpose.msra.mxu0 0.0
  %1229 = vmatpush.xpose.msra.mxu0 0.0
  %1230 = vmatpush.xpose.msra.mxu0 0.0
  %1231 = vmatpush.xpose.msra.mxu0 0.0
  %1232 = vmatpush.xpose.msra.mxu0 0.0
  %1233 = vmatpush.xpose.msra.mxu0 0.0
  %1234 = vmatpush.xpose.msra.mxu0 0.0
  %1235 = vmatpush.xpose.msra.mxu0 0.0
  %1236 = vmatpush.xpose.msra.mxu0 0.0
  %1237 = vmatpush.xpose.msra.mxu0 %v1221
  %1238 = vmatpush.xpose.msra.mxu0 %v1219
  %1239 = vmatmul.f32.gmra.mxu0 %v1215
  %v1240 = vpop.f32.mrf.mxu0
  %v1241 = vadd.f32 0.0, %v1240
  %1242 = vmatmul.f32.gmra.mxu0 %v1217
  %v1243 = vpop.f32.mrf.mxu0
  %v1244 = vadd.f32 0.0, %v1243
  %1245 = vdwg.mxu0
  %v1246 = vmul.f32 %v1241, 0.35355338
  %v1247 = vmul.f32 %v1244, 0.35355338
  %v1248 = vadd.f32 %v1246, %v92
  %v1249 = vadd.f32 %v1247, %v93
  %v1250 = vsel %vm172, %v1248, -inf
  %1251 = vmax.xlane.f32.xlu0 %v1250
  %v1252 = vpop.xlane.xlu0 %1251
  %v1253 = vsel %vm172, %v1249, -inf
  %1254 = vmax.xlane.f32.xlu0 %v1253
  %v1255 = vpop.xlane.xlu0 %1254
  %v1256 = vsub.f32 %v1248, %v1252
  %v1257 = vsub.f32 %v1249, %v1255
  %v1258 = vmul.f32 %v1256, 1.442695
  %v1259 = vpow.pop %v1258
  %v1260 = vmul.f32 %v1257, 1.442695
  %v1261 = vpow.pop %v1260
  %v1262 = vsel %vm172, %v1259, 0.0
  %1263 = vadd.xlane.f32.xlu0 %v1262
  %v1264 = vpop.xlane.xlu0 %1263
  %v1265 = vsel %vm172, %v1261, 0.0
  %1266 = vadd.xlane.f32.xlu0 %v1265
  %v1267 = vpop.xlane.xlu0 %1266
  %v1268 = vrcp.pop %v1264
  %v1269 = vrcp.pop %v1267
  %v1270 = vmul.f32 %v1259, %v1268
  %v1271 = vmul.f32 %v1261, %v1269
  %1272 = vrot.lane.b32.xlu0 %v905, 40
  %v1273 = vpop.permute.xlu0 %1272
  %1274 = vrot.lane.b32.xlu0 %v907, 40
  %v1275 = vpop.permute.xlu0 %1274
  %v1279 = vsel %vm172, %v1270, 0
  %v1282 = vsel %vm172, %v1271, 0
  %1284 = vmatpush.msra.mxu0 0.0
  %1285 = vmatpush.msra.mxu0 0.0
  %1286 = vmatpush.msra.mxu0 0.0
  %1287 = vmatpush.msra.mxu0 0.0
  %1288 = vmatpush.msra.mxu0 0.0
  %1289 = vmatpush.msra.mxu0 0.0
  %1290 = vmatpush.msra.mxu0 0.0
  %1291 = vmatpush.msra.mxu0 0.0
  %1292 = vmatpush.msra.mxu0 0.0
  %1293 = vmatpush.msra.mxu0 0.0
  %1294 = vmatpush.msra.mxu0 0.0
  %1295 = vmatpush.msra.mxu0 0.0
  %1296 = vmatpush.msra.mxu0 0.0
  %1297 = vmatpush.msra.mxu0 0.0
  %1298 = vmatpush.msra.mxu0 %v1275
  %1299 = vmatpush.msra.mxu0 %v1273
  %1300 = vmatmul.f32.gmra.mxu0 %v1279
  %v1301 = vpop.f32.mrf.mxu0
  %v1302 = vadd.f32 0.0, %v1301
  %1303 = vmatmul.f32.gmra.mxu0 %v1282
  %v1304 = vpop.f32.mrf.mxu0
  %v1305 = vadd.f32 0.0, %v1304
  %1306 = vdwg.mxu0
  %1309 = vrot.lane.b32.xlu0 %v1102, 8
  %v1310 = vpop.permute.xlu0 %1309
  %1311 = vrot.lane.b32.xlu0 %v1105, 8
  %v1312 = vpop.permute.xlu0 %1311
  %1317 = vrot.lane.b32.xlu0 %v1202, 16
  %v1318 = vpop.permute.xlu0 %1317
  %1319 = vrot.lane.b32.xlu0 %v1205, 16
  %v1320 = vpop.permute.xlu0 %1319
  %1325 = vrot.lane.b32.xlu0 %v1302, 24
  %v1326 = vpop.permute.xlu0 %1325
  %1327 = vrot.lane.b32.xlu0 %v1305, 24
  %v1328 = vpop.permute.xlu0 %1327
  %v1331 = vsel %vm136, %v1002, %v1310
  %v1332 = vsel %vm136, %v1005, %v1312
  %v1333 = vsel %vm172, %v1331, %v1318
  %v1334 = vsel %vm172, %v1332, %v1320
  %v1335 = vsel %vm558, %v1333, %v1326
  %v1336 = vsel %vm558, %v1334, %v1328
  %v1337 = vpack.c.bf16 %v1336, %v1335
  %s1338 = scalar_lea.vmem %s4, 16
  %v1339 = vld [vmem:[%s1338] sm:$0xf]
  %v1340 = vld [vmem:[%s1338 + $0x4] sm:$0xf]
  %v1341 = vld [vmem:[%s1338 + $0x8] sm:$0xf]
  %v1342 = vld [vmem:[%s1338 + $0xc] sm:$0xf]
  %v1343 = vld [vmem:[%s7 + $0x31] sm:$0x1]
  %v1344 = vperm.slane %v1343, 0
  %v1349 = vunpack.c.l.b16 %v1339
  %v1350 = vunpack.c.l.b16 %v1340
  %v1351 = vunpack.c.l.b16 %v1341
  %v1352 = vunpack.c.l.b16 %v1342
  %v1353 = vpack.c.b16 %v1350, %v1349
  %v1354 = vpack.c.b16 %v1352, %v1351
  %v1358 = vsel %vm34, %v1337, 0
  %1360 = vmatpush.bf16.msra.mxu0 0
  %1361 = vmatpush.bf16.msra.mxu0 0
  %1362 = vmatpush.bf16.msra.mxu0 0
  %1363 = vmatpush.bf16.msra.mxu0 0
  %1364 = vmatpush.bf16.msra.mxu0 0
  %1365 = vmatpush.bf16.msra.mxu0 0
  %1366 = vmatpush.bf16.msra.mxu0 %v1354
  %1367 = vmatpush.bf16.msra.mxu0 %v1353
  %1368 = vmatmul.bf16.gmra.mxu0 %v1358
  %v1369 = vpop.f32.mrf.mxu0
  %v1370 = vadd.f32 %v1344, %v1369
  %v1371 = vpop.f32.mrf.mxu0
  %v1372 = vadd.f32 %v1344, %v1371
  %1373 = vdwg.mxu0
  %v1374 = vadd.f32 %v870, %v1370
  %v1375 = vadd.f32 %v871, %v1372
  %v1376 = vld [vmem:[%s7 + $0x32] sm:$0x1]
  %v1377 = vld [vmem:[%s7 + $0x33] sm:$0x1]
  %v1378 = vsel %vm34, %v1374, 0.0
  %1379 = vadd.xlane.f32.xlu0 %v1378
  %v1380 = vpop.xlane.xlu0 %1379
  %v1381 = vsel %vm34, %v1375, 0.0
  %1382 = vadd.xlane.f32.xlu0 %v1381
  %v1383 = vpop.xlane.xlu0 %1382
  %v1384 = vmul.f32 %v1380, %v47
  %v1385 = vmul.f32 %v1383, %v47
  %v1386 = vsub.f32 %v1374, %v1384
  %v1387 = vsub.f32 %v1375, %v1385
  %v1388 = vmul.f32 %v1386, %v1386
  %v1389 = vmul.f32 %v1387, %v1387
  %v1390 = vsel %vm34, %v1388, 0.0
  %1391 = vadd.xlane.f32.xlu0 %v1390
  %v1392 = vpop.xlane.xlu0 %1391
  %v1393 = vsel %vm34, %v1389, 0.0
  %1394 = vadd.xlane.f32.xlu0 %v1393
  %v1395 = vpop.xlane.xlu0 %1394
  %v1396 = vmul.f32 %v1392, %v47
  %v1397 = vmul.f32 %v1395, %v47
  %v1398 = vadd.f32 %v1396, 1e-12
  %v1399 = vadd.f32 %v1397, 1e-12
  %v1400 = vrsqrt.pop %v1398
  %v1401 = vmul.f32 %v1400, %v1398
  %v1402 = vmul.f32 %v1401, %v1400
  %v1403 = vmul.f32 0.5, %v1402
  %v1404 = vsub.f32 1.5, %v1403
  %v1405 = vmul.f32 %v1400, %v1404
  %vm1406 = vweird.f32 %v1398
  %vm1407 = vweird.f32 %v1400
  %vm1408 = vmor %vm1406, %vm1407
  %v1409 = vsel %vm1408, %v1400, %v1405
  %v1410 = vrsqrt.pop %v1399
  %v1411 = vmul.f32 %v1410, %v1399
  %v1412 = vmul.f32 %v1411, %v1410
  %v1413 = vmul.f32 0.5, %v1412
  %v1414 = vsub.f32 1.5, %v1413
  %v1415 = vmul.f32 %v1410, %v1414
  %vm1416 = vweird.f32 %v1399
  %vm1417 = vweird.f32 %v1410
  %vm1418 = vmor %vm1416, %vm1417
  %v1419 = vsel %vm1418, %v1410, %v1415
  %v1420 = vmul.f32 %v1386, %v1409
  %v1421 = vmul.f32 %v1387, %v1419
  %v1422 = vperm.slane %v1376, 0
  %v1423 = vmul.f32 %v1420, %v1422
  %v1424 = vmul.f32 %v1421, %v1422
  %v1425 = vperm.slane %v1377, 0
  %v1426 = vadd.f32 %v1423, %v1425
  %v1427 = vadd.f32 %v1424, %v1425
  %v1428 = vpack.c.bf16 %v1427, %v1426
  %s1429 = scalar_lea.vmem %s5, 16
  %v1430 = vld [vmem:[%s1429] sm:$0xf]
  %v1431 = vld [vmem:[%s1429 + $0x4] sm:$0xf]
  %v1432 = vld [vmem:[%s1429 + $0x8] sm:$0xf]
  %v1433 = vld [vmem:[%s1429 + $0xc] sm:$0xf]
  %v1434 = vld [vmem:[%s7 + $0x34] sm:$0x1]
  %v1435 = vperm.slane %v1434, 0
  %v1440 = vunpack.c.l.b16 %v1430
  %v1441 = vunpack.c.l.b16 %v1431
  %v1442 = vunpack.c.l.b16 %v1432
  %v1443 = vunpack.c.l.b16 %v1433
  %v1444 = vpack.c.b16 %v1441, %v1440
  %v1445 = vpack.c.b16 %v1443, %v1442
  %v1449 = vsel %vm34, %v1428, 0
  %1451 = vmatpush.bf16.msra.mxu0 0
  %1452 = vmatpush.bf16.msra.mxu0 0
  %1453 = vmatpush.bf16.msra.mxu0 0
  %1454 = vmatpush.bf16.msra.mxu0 0
  %1455 = vmatpush.bf16.msra.mxu0 0
  %1456 = vmatpush.bf16.msra.mxu0 0
  %1457 = vmatpush.bf16.msra.mxu0 %v1445
  %1458 = vmatpush.bf16.msra.mxu0 %v1444
  %1459 = vmatmul.bf16.gmra.mxu0 %v1449
  %v1460 = vpop.f32.mrf.mxu0
  %v1461 = vadd.f32 %v1435, %v1460
  %v1462 = vpop.f32.mrf.mxu0
  %v1463 = vadd.f32 %v1435, %v1462
  %1464 = vdwg.mxu0
  %v1465 = vmul.f32 %v1461, 0.5
  %v1466 = vmul.f32 %v1463, 0.5
  %v1467 = vmul.f32 %v1461, 0.70710677
  %v1468 = vmul.f32 %v1463, 0.70710677
  %vm1469 = vcmp.ge.f32.partialorder %v1467, 0.0
  %vm1470 = vcmp.ge.f32.partialorder %v1468, 0.0
  %v1471 = vsel %vm1469, 1.0, -1.0
  %v1472 = vsel %vm1470, 1.0, -1.0
  %v1473 = vand.u32 2147483647, %v1467
  %v1474 = vand.u32 2147483647, %v1468
  %v1475 = vmul.f32 %v1473, 0.3275911
  %v1476 = vmul.f32 %v1474, 0.3275911
  %v1477 = vadd.f32 %v1475, 1.0
  %v1478 = vadd.f32 %v1476, 1.0
  %v1479 = vrcp.pop %v1477
  %v1480 = vmul.f32 %v1477, %v1479
  %v1481 = vsub.f32 1.0, %v1480
  %v1482 = vmul.f32 %v1479, %v1481
  %v1483 = vadd.f32 %v1479, %v1482
  %vm1484 = vweird.f32 %v1477
  %vm1485 = vweird.f32 %v1479
  %vm1486 = vmor %vm1484, %vm1485
  %v1487 = vsel %vm1486, %v1479, %v1483
  %v1488 = vand.u32 2147483647, %v1477
  %vm1489 = vcmp.eq.f32.partialorder %v1488, 8.507059e+37
  %v1490 = vand.u32 %v1477, 2147483648
  %v1491 = vor.u32 1.1754944e-38, %v1490
  %v1492 = vsel %vm1489, %v1491, %v1487
  %v1493 = vrcp.pop %v1478
  %v1494 = vmul.f32 %v1478, %v1493
  %v1495 = vsub.f32 1.0, %v1494
  %v1496 = vmul.f32 %v1493, %v1495
  %v1497 = vadd.f32 %v1493, %v1496
  %vm1498 = vweird.f32 %v1478
  %vm1499 = vweird.f32 %v1493
  %vm1500 = vmor %vm1498, %vm1499
  %v1501 = vsel %vm1500, %v1493, %v1497
  %v1502 = vand.u32 2147483647, %v1478
  %vm1503 = vcmp.eq.f32.partialorder %v1502, 8.507059e+37
  %v1504 = vand.u32 %v1478, 2147483648
  %v1505 = vor.u32 1.1754944e-38, %v1504
  %v1506 = vsel %vm1503, %v1505, %v1501
  %v1507 = vmul.f32 %v1492, 1.0614054
  %v1508 = vmul.f32 %v1506, 1.0614054
  %v1509 = vadd.f32 %v1507, -1.4531521
  %v1510 = vadd.f32 %v1508, -1.4531521
  %v1511 = vmul.f32 %v1509, %v1492
  %v1512 = vmul.f32 %v1510, %v1506
  %v1513 = vadd.f32 %v1511, 1.4214138
  %v1514 = vadd.f32 %v1512, 1.4214138
  %v1515 = vmul.f32 %v1513, %v1492
  %v1516 = vmul.f32 %v1514, %v1506
  %v1517 = vadd.f32 %v1515, -0.28449672
  %v1518 = vadd.f32 %v1516, -0.28449672
  %v1519 = vmul.f32 %v1517, %v1492
  %v1520 = vmul.f32 %v1518, %v1506
  %v1521 = vadd.f32 %v1519, 0.2548296
  %v1522 = vadd.f32 %v1520, 0.2548296
  %v1523 = vmul.f32 %v1521, %v1492
  %v1524 = vmul.f32 %v1522, %v1506
  %v1525 = vmul.f32 %v1473, %v1473
  %v1526 = vmul.f32 %v1474, %v1474
  %v1527 = vsub.f32 0.0, %v1525
  %v1528 = vsub.f32 0.0, %v1526
  %v1529 = vmul.f32 %v1527, 1.442695
  %v1530 = vpow.pop %v1529
  %v1531 = vmul.f32 %v1528, 1.442695
  %v1532 = vpow.pop %v1531
  %v1533 = vmul.f32 %v1523, %v1530
  %v1534 = vmul.f32 %v1524, %v1532
  %v1535 = vsub.f32 1.0, %v1533
  %v1536 = vsub.f32 1.0, %v1534
  %v1537 = vmul.f32 %v1471, %v1535
  %v1538 = vmul.f32 %v1472, %v1536
  %v1539 = vadd.f32 %v1537, 1.0
  %v1540 = vadd.f32 %v1538, 1.0
  %v1541 = vmul.f32 %v1465, %v1539
  %v1542 = vmul.f32 %v1466, %v1540
  %v1543 = vpack.c.bf16 %v1542, %v1541
  %s1544 = scalar_lea.vmem %s6, 32
  %v1545 = vld [vmem:[%s1544] sm:$0xf]
  %v1546 = vld [vmem:[%s1544 + $0x4] sm:$0xf]
  %v1547 = vld [vmem:[%s1544 + $0x8] sm:$0xf]
  %v1548 = vld [vmem:[%s1544 + $0xc] sm:$0xf]
  %v1549 = vld [vmem:[%s1544 + $0x10] sm:$0xf]
  %v1550 = vld [vmem:[%s1544 + $0x14] sm:$0xf]
  %v1551 = vld [vmem:[%s1544 + $0x18] sm:$0xf]
  %v1552 = vld [vmem:[%s1544 + $0x1c] sm:$0xf]
  %v1553 = vld [vmem:[%s7 + $0x35] sm:$0x1]
  %v1554 = vperm.slane %v1553, 0
  %v1563 = vunpack.c.l.b16 %v1545
  %v1564 = vunpack.c.l.b16 %v1546
  %v1565 = vunpack.c.l.b16 %v1547
  %v1566 = vunpack.c.l.b16 %v1548
  %v1567 = vunpack.c.l.b16 %v1549
  %v1568 = vunpack.c.l.b16 %v1550
  %v1569 = vunpack.c.l.b16 %v1551
  %v1570 = vunpack.c.l.b16 %v1552
  %v1571 = vpack.c.b16 %v1564, %v1563
  %v1572 = vpack.c.b16 %v1566, %v1565
  %v1573 = vpack.c.b16 %v1568, %v1567
  %v1574 = vpack.c.b16 %v1570, %v1569
  %v1580 = vsel %vm800, %v1543, 0
  %1582 = vmatpush.bf16.msra.mxu0 0
  %1583 = vmatpush.bf16.msra.mxu0 0
  %1584 = vmatpush.bf16.msra.mxu0 0
  %1585 = vmatpush.bf16.msra.mxu0 0
  %1586 = vmatpush.bf16.msra.mxu0 %v1574
  %1587 = vmatpush.bf16.msra.mxu0 %v1573
  %1588 = vmatpush.bf16.msra.mxu0 %v1572
  %1589 = vmatpush.bf16.msra.mxu0 %v1571
  %1590 = vmatmul.bf16.gmra.mxu0 %v1580
  %v1591 = vpop.f32.mrf.mxu0
  %v1592 = vadd.f32 %v1554, %v1591
  %v1593 = vpop.f32.mrf.mxu0
  %v1594 = vadd.f32 %v1554, %v1593
  %1595 = vdwg.mxu0
  %v1596 = vadd.f32 %v1426, %v1592
  %v1597 = vadd.f32 %v1427, %v1594
  %v1598 = vld [vmem:[%s7 + $0x36] sm:$0x1]
  %v1599 = vld [vmem:[%s7 + $0x37] sm:$0x1]
  %v1600 = vsel %vm34, %v1596, 0.0
  %1601 = vadd.xlane.f32.xlu0 %v1600
  %v1602 = vpop.xlane.xlu0 %1601
  %v1603 = vsel %vm34, %v1597, 0.0
  %1604 = vadd.xlane.f32.xlu0 %v1603
  %v1605 = vpop.xlane.xlu0 %1604
  %v1606 = vmul.f32 %v1602, %v47
  %v1607 = vmul.f32 %v1605, %v47
  %v1608 = vsub.f32 %v1596, %v1606
  %v1609 = vsub.f32 %v1597, %v1607
  %v1610 = vmul.f32 %v1608, %v1608
  %v1611 = vmul.f32 %v1609, %v1609
  %v1612 = vsel %vm34, %v1610, 0.0
  %1613 = vadd.xlane.f32.xlu0 %v1612
  %v1614 = vpop.xlane.xlu0 %1613
  %v1615 = vsel %vm34, %v1611, 0.0
  %1616 = vadd.xlane.f32.xlu0 %v1615
  %v1617 = vpop.xlane.xlu0 %1616
  %v1618 = vmul.f32 %v1614, %v47
  %v1619 = vmul.f32 %v1617, %v47
  %v1620 = vadd.f32 %v1618, 1e-12
  %v1621 = vadd.f32 %v1619, 1e-12
  %v1622 = vrsqrt.pop %v1620
  %v1623 = vmul.f32 %v1622, %v1620
  %v1624 = vmul.f32 %v1623, %v1622
  %v1625 = vmul.f32 0.5, %v1624
  %v1626 = vsub.f32 1.5, %v1625
  %v1627 = vmul.f32 %v1622, %v1626
  %vm1628 = vweird.f32 %v1620
  %vm1629 = vweird.f32 %v1622
  %vm1630 = vmor %vm1628, %vm1629
  %v1631 = vsel %vm1630, %v1622, %v1627
  %v1632 = vrsqrt.pop %v1621
  %v1633 = vmul.f32 %v1632, %v1621
  %v1634 = vmul.f32 %v1633, %v1632
  %v1635 = vmul.f32 0.5, %v1634
  %v1636 = vsub.f32 1.5, %v1635
  %v1637 = vmul.f32 %v1632, %v1636
  %vm1638 = vweird.f32 %v1621
  %vm1639 = vweird.f32 %v1632
  %vm1640 = vmor %vm1638, %vm1639
  %v1641 = vsel %vm1640, %v1632, %v1637
  %v1642 = vmul.f32 %v1608, %v1631
  %v1643 = vmul.f32 %v1609, %v1641
  %v1644 = vperm.slane %v1598, 0
  %v1645 = vmul.f32 %v1642, %v1644
  %v1646 = vmul.f32 %v1643, %v1644
  %v1647 = vperm.slane %v1599, 0
  %v1648 = vadd.f32 %v1645, %v1647
  %v1649 = vadd.f32 %v1646, %v1647
  %v1650 = vld [vmem:[%s7] sm:$0xff]
  %v1651 = vld [vmem:[%s7 + $0x8] sm:$0xff]
  %v1652 = vld [vmem:[%s7 + $0x10] sm:$0xff]
  %v1653 = vld [vmem:[%s7 + $0x18] sm:$0xff]
  %v1654 = vld [vmem:[%s7 + $0x20] sm:$0xf]
  %v1655 = vld [vmem:[%s7 + $0x24] sm:$0x1]
  %v1656 = vld [vmem:[%s2] sm:$0xff]
  %v1657 = vld [vmem:[%s2 + $0x8] sm:$0xff]
  %vm1658 = vcmask 31744
  %v1660 = vsel %vm1658, %v1656, 0
  %v1663 = vsel %vm1658, %v1657, 0
  %vm1665 = vcmask 1043456
  %v1667 = vsel %vm1665, %v1654, 0
  %1669 = vmatpush.msra.mxu0 0.0
  %1670 = vmatpush.msra.mxu0 0.0
  %1671 = vmatpush.msra.mxu0 0.0
  %1672 = vmatpush.msra.mxu0 0.0
  %1673 = vmatpush.msra.mxu0 0.0
  %1674 = vmatpush.msra.mxu0 0.0
  %1675 = vmatpush.msra.mxu0 0.0
  %1676 = vmatpush.msra.mxu0 0.0
  %1677 = vmatpush.msra.mxu0 0.0
  %1678 = vmatpush.msra.mxu0 0.0
  %1679 = vmatpush.msra.mxu0 0.0
  %1680 = vmatpush.msra.mxu0 0.0
  %1681 = vmatpush.msra.mxu0 0.0
  %1682 = vmatpush.msra.mxu0 0.0
  %1683 = vmatpush.msra.mxu0 0.0
  %1684 = vmatpush.msra.mxu0 %v1667
  %1685 = vmatmul.f32.gmra.mxu0 %v1660
  %v1686 = vpop.f32.mrf.mxu0
  %v1687 = vadd.f32 0.0, %v1686
  %1688 = vmatmul.f32.gmra.mxu0 %v1663
  %v1689 = vpop.f32.mrf.mxu0
  %v1690 = vadd.f32 0.0, %v1689
  %1691 = vdwg.mxu0
  %v1693 = vsel %vm34, %v1648, 0
  %v1696 = vsel %vm34, %v1649, 0
  %1698 = vmatpush.msra.mxu0 0.0
  %1699 = vmatpush.msra.mxu0 0.0
  %1700 = vmatpush.msra.mxu0 0.0
  %1701 = vmatpush.msra.mxu0 0.0
  %1702 = vmatpush.msra.mxu0 0.0
  %1703 = vmatpush.msra.mxu0 0.0
  %1704 = vmatpush.msra.mxu0 0.0
  %1705 = vmatpush.msra.mxu0 0.0
  %1706 = vmatpush.msra.mxu0 0.0
  %1707 = vmatpush.msra.mxu0 0.0
  %1708 = vmatpush.msra.mxu0 0.0
  %1709 = vmatpush.msra.mxu0 0.0
  %1710 = vmatpush.msra.mxu0 %v1653
  %1711 = vmatpush.msra.mxu0 %v1652
  %1712 = vmatpush.msra.mxu0 %v1651
  %1713 = vmatpush.msra.mxu0 %v1650
  %1714 = vmatmul.f32.gmra.mxu0 %v1693
  %v1715 = vpop.f32.mrf.mxu0
  %v1716 = vadd.f32 %v1687, %v1715
  %1717 = vmatmul.f32.gmra.mxu0 %v1696
  %v1718 = vpop.f32.mrf.mxu0
  %v1719 = vadd.f32 %v1690, %v1718
  %1720 = vdwg.mxu0
  %v1721 = vperm.slane %v1655, 0
  %v1722 = vadd.f32 %v1716, %v1721
  %v1723 = vadd.f32 %v1719, %v1721
  %1724 = vst [vmem:[%s8] sm:$0xff] %v1722
  %1725 = vst [vmem:[%s8 + $0x8] sm:$0xff] %v1723
  // Predicated region
  $region34: #{forward.1} parent=0 // pred_check
    _
  $region35: #{forward.1} parent=0 // pred_check_branch
    %1727 = sbr.rel (0) target = $region37
  $region36: #{forward.1} parent=0 // pred_region
    _
  $region37: #{forward.1} parent=0 // pred_fallthru
    _
  // Predicated region
  $region38: #{forward.1} parent=0 // pred_check
    _
  $region39: #{forward.1} parent=0 // pred_check_branch
    %1729 = sbr.rel (0) target = $region41
  $region40: #{forward.1} parent=0 // pred_region
    _
  $region41: #{forward.1} parent=0 // pred_fallthru
    _

</llo_original>
